<compile_context>
chip_gen: v7x
topology: tpu7x:2x2x1
jax: 0.10.0
libtpu: 0.0.40
codegen_flags: <defaults>
</compile_context>

<pallas_src>
import math
import functools

import jax
import jax.numpy as jnp
from jax import lax
from jax.experimental import pallas as pl
from jax.experimental.pallas import tpu as pltpu


# ------------------------------- helpers -------------------------------

def _round_up(x, m):
    return (x + m - 1) // m * m


def _vmem_limit(resident_bytes):
    # Blocks are double-buffered by the pipeline; add headroom, cap for v7x.
    return int(min(max(2 * resident_bytes + (4 << 20), 16 << 20), 56 << 20))


# ------------------------- fused input projection -------------------------
# gx = x2d @ W_i + b_i over ALL timesteps at once ([B*T, K] @ [K, 3*Hp]).

def _proj_kernel(x_ref, w_ref, b_ref, o_ref, acc_ref):
    @pl.when(pl.program_id(2) == 0)
    def _():
        acc_ref[...] = jnp.broadcast_to(b_ref[...], acc_ref.shape)

    acc_ref[...] += jnp.dot(
        x_ref[...].astype(jnp.bfloat16), w_ref[...],
        preferred_element_type=jnp.float32)

    @pl.when(pl.program_id(2) == pl.num_programs(2) - 1)
    def _():
        o_ref[...] = acc_ref[...]


def fused_input_proj(x2d, w_bf16, b_f32):
    M, K = x2d.shape
    N = w_bf16.shape[1]                      # 3 * Hp, multiple of 128

    tm = min(_round_up(M, 8), 256)
    Mp = _round_up(M, tm)
    if Mp != M:
        x2d = jnp.pad(x2d, ((0, Mp - M), (0, 0)))

    if K <= 512:
        tk, Kp = K, K
    else:
        tk = 512
        Kp = _round_up(K, tk)
        if Kp != K:
            x2d = jnp.pad(x2d, ((0, 0), (0, Kp - K)))
            w_bf16 = jnp.pad(w_bf16, ((0, Kp - K), (0, 0)))

    tn = N if N <= 2048 else N // 3          # N // 3 == Hp, a multiple of 128

    b2d = b_f32.reshape(1, N)
    grid = (Mp // tm, N // tn, Kp // tk)

    resident = (2 * tm * tk * 4 + 2 * tk * tn * 2 + 2 * tn * 4
                + 2 * tm * tn * 4 + tm * tn * 4)
    cost = pl.CostEstimate(
        flops=2 * Mp * Kp * N, transcendentals=0,
        bytes_accessed=4 * Mp * Kp + 2 * Kp * N + 4 * N + 4 * Mp * N)

    out = pl.pallas_call(
        _proj_kernel,
        grid=grid,
        in_specs=[
            pl.BlockSpec((tm, tk), lambda i, j, k: (i, k)),
            pl.BlockSpec((tk, tn), lambda i, j, k: (k, j)),
            pl.BlockSpec((1, tn), lambda i, j, k: (0, j)),
        ],
        out_specs=pl.BlockSpec((tm, tn), lambda i, j, k: (i, j)),
        out_shape=jax.ShapeDtypeStruct((Mp, N), jnp.float32),
        scratch_shapes=[pltpu.VMEM((tm, tn), jnp.float32)],
        compiler_params=pltpu.CompilerParams(
            dimension_semantics=("parallel", "parallel", "arbitrary"),
            vmem_limit_bytes=_vmem_limit(resident)),
        cost_estimate=cost,
    )(x2d, w_bf16, b2d)
    return out[:M] if Mp != M else out


# ------------------------------ GRU recurrence ------------------------------

def _gru_scan_kernel(gx_ref, h0_ref, wh_ref, bhn_ref, y_ref, hN_ref, h_scr,
                     *, hidden_p, time_chunk):
    tc = pl.program_id(1)

    @pl.when(tc == 0)
    def _():
        h_scr[...] = h0_ref[...]

    Hp = hidden_p
    wh = wh_ref[...]                 # (Hp, 3Hp) bf16, pinned across the scan
    bhn = bhn_ref[...]               # (1, Hp)  f32
    h = h_scr[...]                   # (tb, Hp) f32

    for tt in range(time_chunk):     # static trip count -> fully unrolled
        gx = gx_ref[:, tt, :]        # (tb, 3Hp); r/z hidden biases pre-folded
        gh = jnp.dot(h.astype(jnp.bfloat16), wh,
                     preferred_element_type=jnp.float32)
        r = jax.nn.sigmoid(gx[:, 0:Hp] + gh[:, 0:Hp])
        z = jax.nn.sigmoid(gx[:, Hp:2 * Hp] + gh[:, Hp:2 * Hp])
        n = jnp.tanh(gx[:, 2 * Hp:] + r * (gh[:, 2 * Hp:] + bhn))
        h = z * h + (1.0 - z) * n
        y_ref[:, tt, :] = h          # dropout(h) == h in eval mode

    h_scr[...] = h

    @pl.when(tc == pl.num_programs(1) - 1)
    def _():
        hN_ref[...] = h


def gru_scan(gx, h0p, w_h_bf16, b_hn_f32, *, hidden_p):
    B, T, N3 = gx.shape
    Hp = hidden_p

    # Timestep chunk: multiple of 8 (sublane tile) or the full T.
    if T % 8 != 0:
        TT = T
    elif T % 32 == 0:
        TT = 32
    elif T % 16 == 0:
        TT = 16
    else:
        TT = 8
    nt = T // TT

    # Batch split (v7x second TensorCore) only when blocks stay 8-aligned.
    if B % 16 == 0:
        nb, tb = 2, B // 2
    else:
        nb, tb = 1, B

    bhn2d = b_hn_f32.reshape(1, Hp)

    resident = (2 * tb * TT * N3 * 4 + 2 * tb * Hp * 4 + 2 * Hp * N3 * 2
                + 2 * Hp * 4 + 2 * tb * TT * Hp * 4 + 2 * tb * Hp * 4
                + tb * Hp * 4)
    cost = pl.CostEstimate(
        flops=2 * B * T * Hp * N3 + 10 * B * T * Hp,
        transcendentals=3 * B * T * Hp,
        bytes_accessed=(4 * B * T * N3 + 2 * Hp * N3 + 4 * Hp
                        + 4 * B * Hp + 4 * B * T * Hp + 4 * B * Hp))

    y, h_last = pl.pallas_call(
        functools.partial(_gru_scan_kernel, hidden_p=Hp, time_chunk=TT),
        grid=(nb, nt),
        in_specs=[
            pl.BlockSpec((tb, TT, N3), lambda b, t: (b, t, 0)),   # input gates
            pl.BlockSpec((tb, Hp), lambda b, t: (b, 0)),          # h0
            pl.BlockSpec((Hp, N3), lambda b, t: (0, 0)),          # W_h (pinned)
            pl.BlockSpec((1, Hp), lambda b, t: (0, 0)),           # b_hn (pinned)
        ],
        out_specs=[
            pl.BlockSpec((tb, TT, Hp), lambda b, t: (b, t, 0)),   # y
            pl.BlockSpec((tb, Hp), lambda b, t: (b, 0)),          # h_last
        ],
        out_shape=[
            jax.ShapeDtypeStruct((B, T, Hp), jnp.float32),
            jax.ShapeDtypeStruct((B, Hp), jnp.float32),
        ],
        scratch_shapes=[pltpu.VMEM((tb, Hp), jnp.float32)],
        compiler_params=pltpu.CompilerParams(
            dimension_semantics=("parallel", "arbitrary"),
            vmem_limit_bytes=_vmem_limit(resident)),
        cost_estimate=cost,
    )(gx, h0p, w_h_bf16, bhn2d)
    return y, h_last


# ------------------------------- model (glue) -------------------------------

def gru_forward(params, x, h0, *, hidden_size):
    """GRUCell.forward: x [B, T, K], h0 [B, H] -> (y [B, T, H], h_last [B, H])."""
    B, T, K = x.shape
    H = hidden_size
    Hp = params["b_hn"].shape[0]

    # Fused input projections over all timesteps; reshape merges adjacent dims
    # of a contiguous array (free — no transpose, no extra HBM pass).
    gx = fused_input_proj(x.reshape(B * T, K), params["w_i"], params["b_i"])
    gx = gx.reshape(B, T, 3 * Hp)

    h0p = jnp.pad(h0, ((0, 0), (0, Hp - H))) if Hp > H else h0
    y_p, h_last_p = gru_scan(gx, h0p, params["w_h"], params["b_hn"], hidden_p=Hp)
    if Hp > H:
        return y_p[:, :, :H], h_last_p[:, :H]
    return y_p, h_last_p


def gru_reference(p, x, h0):
    """Pure-JAX f32 reference mirroring the PyTorch loop."""
    def step(h, x_t):
        r = jax.nn.sigmoid(x_t @ p["wir"] + p["bir"] + h @ p["whr"] + p["bhr"])
        z = jax.nn.sigmoid(x_t @ p["wiz"] + p["biz"] + h @ p["whz"] + p["bhz"])
        n = jnp.tanh(x_t @ p["win"] + p["bin"] + r * (h @ p["whn"] + p["bhn"]))
        h_new = z * h + (1.0 - z) * n
        return h_new, h_new
    h_last, ys = lax.scan(step, h0, jnp.transpose(x, (1, 0, 2)))
    return jnp.transpose(ys, (1, 0, 2)), h_last


# --------------------------- deterministic init ---------------------------

def _init_linear(key, d_in, d_out):
    k1, k2 = jax.random.split(key)
    bound = 1.0 / math.sqrt(d_in)
    w = jax.random.uniform(k1, (d_in, d_out), jnp.float32, -bound, bound)
    b = jax.random.uniform(k2, (d_out,), jnp.float32, -bound, bound)
    return w, b


def init_gru(key, input_size, hidden_size):
    ks = jax.random.split(key, 6)
    p = {}
    p["wir"], p["bir"] = _init_linear(ks[0], input_size, hidden_size)
    p["whr"], p["bhr"] = _init_linear(ks[1], hidden_size, hidden_size)
    p["wiz"], p["biz"] = _init_linear(ks[2], input_size, hidden_size)
    p["whz"], p["bhz"] = _init_linear(ks[3], hidden_size, hidden_size)
    p["win"], p["bin"] = _init_linear(ks[4], input_size, hidden_size)
    p["whn"], p["bhn"] = _init_linear(ks[5], hidden_size, hidden_size)
    return p


def pack_params(p, hidden_size):
    """Fuse the 6 linears into lane-dense, gate-tile-aligned kernel weights.

    Hidden size is zero-padded to Hp (multiple of 128) so each gate occupies a
    full lane tile; padded lanes stay exactly 0 through the recurrence because
    all padded weight rows/cols and biases are 0.
    """
    H = hidden_size
    Hp = _round_up(max(H, 128), 128)

    def pad_cols(w):   # (d, H) -> (d, Hp)
        return jnp.pad(w, ((0, 0), (0, Hp - H)))

    def pad_vec(v):    # (H,) -> (Hp,)
        return jnp.pad(v, (0, Hp - H))

    def pad_sq(w):     # (H, H) -> (Hp, Hp)
        return jnp.pad(w, ((0, Hp - H), (0, Hp - H)))

    # Gate order [ r | z | n ], each gate a full Hp lane block.
    w_i = jnp.concatenate(
        [pad_cols(p["wir"]), pad_cols(p["wiz"]), pad_cols(p["win"])], axis=1)
    # r/z hidden biases folded into the input-projection bias.
    b_i = jnp.concatenate(
        [pad_vec(p["bir"] + p["bhr"]),
         pad_vec(p["biz"] + p["bhz"]),
         pad_vec(p["bin"])], axis=0)
    w_h = jnp.concatenate(
        [pad_sq(p["whr"]), pad_sq(p["whz"]), pad_sq(p["whn"])], axis=1)

    return dict(
        w_i=w_i.astype(jnp.bfloat16),        # (K, 3Hp)
        b_i=b_i,                             # (3Hp,)  f32
        w_h=w_h.astype(jnp.bfloat16),        # (Hp, 3Hp)
        b_hn=pad_vec(p["bhn"]),              # (Hp,)   f32
    )


# ----------------------------------- main -----------------------------------

if __name__ == "__main__":
    B, T = 2, 8
    INPUT_SIZE, HIDDEN_SIZE = 16, 32

    root = jax.random.PRNGKey(0)
    k_params, k_x, k_h = jax.random.split(root, 3)

    raw = init_gru(k_params, INPUT_SIZE, HIDDEN_SIZE)
    params = pack_params(raw, HIDDEN_SIZE)
    x = jax.random.normal(k_x, (B, T, INPUT_SIZE), jnp.float32)
    h0 = jax.random.normal(k_h, (B, HIDDEN_SIZE), jnp.float32)

    fwd = jax.jit(functools.partial(gru_forward, hidden_size=HIDDEN_SIZE))
    y, h_last = fwd(params, x, h0)
    jax.block_until_ready((y, h_last))

    assert y.shape == (B, T, HIDDEN_SIZE)
    assert h_last.shape == (B, HIDDEN_SIZE)
    assert y.dtype == jnp.float32 and h_last.dtype == jnp.float32
    assert bool(jnp.all(jnp.isfinite(y))) and bool(jnp.all(jnp.isfinite(h_last)))
    # y's last timestep must equal the returned hidden state (dropout == identity)
    assert bool(jnp.allclose(y[:, -1, :], h_last, atol=1e-6))

    # Numerical check against a pure-JAX f32 reference of the PyTorch loop.
    # Kernels use bf16 weights (f32 accumulation) -> slightly loosened tolerance.
    y_ref, h_ref = gru_reference(raw, x, h0)
    assert bool(jnp.allclose(y, y_ref, atol=2e-2, rtol=2e-2))
    assert bool(jnp.allclose(h_last, h_ref, atol=2e-2, rtol=2e-2))

    print("KERNEL_OK")
</pallas_src>

<mosaic_0001>
module attributes {stable_mosaic.version = 11 : i64} {
  func.func @_proj_kernel(%arg0: i32, %arg1: i32, %arg2: i32, %arg3: memref<16x16xf32, #tpu.memory_space<vmem>>, %arg4: memref<16x384xbf16, #tpu.memory_space<vmem>>, %arg5: memref<1x384xf32, #tpu.memory_space<vmem>>, %arg6: memref<16x384xf32, #tpu.memory_space<vmem>>, %arg7: memref<16x384xf32, #tpu.memory_space<vmem>>) attributes {dimension_semantics = [#tpu.dimension_semantics<parallel>, #tpu.dimension_semantics<parallel>, #tpu.dimension_semantics<arbitrary>], iteration_bounds = array<i64: 1, 1, 1>, scalar_prefetch = 0 : i64, scratch_operands = 1 : i64, tpu.core_type = #tpu.core_type<tc>, window_params = [{transform_indices = @transform_0, window_bounds = array<i64: 16, 16>}, {transform_indices = @transform_1, window_bounds = array<i64: 16, 384>}, {transform_indices = @transform_2, window_bounds = array<i64: 1, 384>}, {transform_indices = @transform_3, window_bounds = array<i64: 16, 384>}]} {
    %c0_i32 = arith.constant 0 : i32
    %0 = arith.cmpi eq, %arg2, %c0_i32 : i32
    %1 = arith.extui %0 : i1 to i32
    %c0_i32_0 = arith.constant 0 : i32
    %2 = arith.cmpi ne, %1, %c0_i32_0 : i32
    scf.if %2 {
      %c0_10 = arith.constant 0 : index
      %c0_11 = arith.constant 0 : index
      %13 = vector.load %arg5[%c0_10, %c0_11] : memref<1x384xf32, #tpu.memory_space<vmem>>, vector<1x384xf32>
      %14 = vector.shape_cast %13 : vector<1x384xf32> to vector<1x384xf32>
      %15 = vector.broadcast %14 : vector<1x384xf32> to vector<16x384xf32>
      %c0_12 = arith.constant 0 : index
      %c0_13 = arith.constant 0 : index
      %16 = vector.load %arg7[%c0_12, %c0_13] : memref<16x384xf32, #tpu.memory_space<vmem>>, vector<16x384xf32>
      tpu.vector_store %arg7[%c0_12, %c0_13], %15 {strides = array<i32>} : memref<16x384xf32, #tpu.memory_space<vmem>>, vector<16x384xf32>,
    } else {
    }
    %c0 = arith.constant 0 : index
    %c0_1 = arith.constant 0 : index
    %3 = vector.load %arg7[%c0, %c0_1] : memref<16x384xf32, #tpu.memory_space<vmem>>, vector<16x384xf32>
    %c0_2 = arith.constant 0 : index
    %c0_3 = arith.constant 0 : index
    %4 = vector.load %arg3[%c0_2, %c0_3] : memref<16x16xf32, #tpu.memory_space<vmem>>, vector<16x16xf32>
    %5 = arith.truncf %4 : vector<16x16xf32> to vector<16x16xbf16>
    %c0_4 = arith.constant 0 : index
    %c0_5 = arith.constant 0 : index
    %6 = vector.load %arg4[%c0_4, %c0_5] : memref<16x384xbf16, #tpu.memory_space<vmem>>, vector<16x384xbf16>
    %cst = arith.constant dense<0.000000e+00> : vector<16x384xf32>
    %7 = tpu.matmul %5, %6, %cst {dimension_numbers = #tpu.dot_dimension_numbers<[1], [0], [0], [1], [0, 0, 1, 1], [], []>} : vector<16x16xbf16>, vector<16x384xbf16>, vector<16x384xf32> -> vector<16x384xf32>
    %8 = arith.addf %3, %7 : vector<16x384xf32>
    %c0_6 = arith.constant 0 : index
    %c0_7 = arith.constant 0 : index
    %9 = vector.load %arg7[%c0_6, %c0_7] : memref<16x384xf32, #tpu.memory_space<vmem>>, vector<16x384xf32>
    tpu.vector_store %arg7[%c0_6, %c0_7], %8 {strides = array<i32>} : memref<16x384xf32, #tpu.memory_space<vmem>>, vector<16x384xf32>,
    %c0_i32_8 = arith.constant 0 : i32
    %10 = arith.cmpi eq, %arg2, %c0_i32_8 : i32
    %11 = arith.extui %10 : i1 to i32
    %c0_i32_9 = arith.constant 0 : i32
    %12 = arith.cmpi ne, %11, %c0_i32_9 : i32
    scf.if %12 {
      %c0_10 = arith.constant 0 : index
      %c0_11 = arith.constant 0 : index
      %13 = vector.load %arg7[%c0_10, %c0_11] : memref<16x384xf32, #tpu.memory_space<vmem>>, vector<16x384xf32>
      %c0_12 = arith.constant 0 : index
      %c0_13 = arith.constant 0 : index
      %14 = vector.load %arg6[%c0_12, %c0_13] : memref<16x384xf32, #tpu.memory_space<vmem>>, vector<16x384xf32>
      tpu.vector_store %arg6[%c0_12, %c0_13], %13 {strides = array<i32>} : memref<16x384xf32, #tpu.memory_space<vmem>>, vector<16x384xf32>,
    } else {
    }
    return
  }
  func.func @transform_0(%arg0: i32, %arg1: i32, %arg2: i32) -> (i32, i32) {
    %c0_i32 = arith.constant 0 : i32
    return %arg0, %arg2 : i32, i32
  }
  func.func @transform_1(%arg0: i32, %arg1: i32, %arg2: i32) -> (i32, i32) {
    %c0_i32 = arith.constant 0 : i32
    return %arg2, %arg1 : i32, i32
  }
  func.func @transform_2(%arg0: i32, %arg1: i32, %arg2: i32) -> (i32, i32) {
    %c0_i32 = arith.constant 0 : i32
    %c0_i32_0 = arith.constant 0 : i32
    return %c0_i32, %arg1 : i32, i32
  }
  func.func @transform_3(%arg0: i32, %arg1: i32, %arg2: i32) -> (i32, i32) {
    %c0_i32 = arith.constant 0 : i32
    return %arg0, %arg1 : i32, i32
  }
}

module attributes {stable_mosaic.version = 11 : i64} {
  func.func @_gru_scan_kernel(%arg0: i32, %arg1: i32, %arg2: memref<2x8x384xf32, #tpu.memory_space<vmem>>, %arg3: memref<2x128xf32, #tpu.memory_space<vmem>>, %arg4: memref<128x384xbf16, #tpu.memory_space<vmem>>, %arg5: memref<1x128xf32, #tpu.memory_space<vmem>>, %arg6: memref<2x8x128xf32, #tpu.memory_space<vmem>>, %arg7: memref<2x128xf32, #tpu.memory_space<vmem>>, %arg8: memref<2x128xf32, #tpu.memory_space<vmem>>) attributes {dimension_semantics = [#tpu.dimension_semantics<parallel>, #tpu.dimension_semantics<arbitrary>], iteration_bounds = array<i64: 1, 1>, scalar_prefetch = 0 : i64, scratch_operands = 1 : i64, tpu.core_type = #tpu.core_type<tc>, window_params = [{transform_indices = @transform_0, window_bounds = array<i64: 2, 8, 384>}, {transform_indices = @transform_1, window_bounds = array<i64: 2, 128>}, {pipeline_mode = #tpu.pipeline_mode<synchronous>, transform_indices = @transform_2, window_bounds = array<i64: 128, 384>}, {pipeline_mode = #tpu.pipeline_mode<synchronous>, transform_indices = @transform_3, window_bounds = array<i64: 1, 128>}, {transform_indices = @transform_4, window_bounds = array<i64: 2, 8, 128>}, {transform_indices = @transform_5, window_bounds = array<i64: 2, 128>}]} {
    %c0_i32 = arith.constant 0 : i32
    %0 = arith.cmpi eq, %arg1, %c0_i32 : i32
    %1 = arith.extui %0 : i1 to i32
    %c0_i32_0 = arith.constant 0 : i32
    %2 = arith.cmpi ne, %1, %c0_i32_0 : i32
    scf.if %2 {
      %c0_82 = arith.constant 0 : index
      %c0_83 = arith.constant 0 : index
      %290 = vector.load %arg3[%c0_82, %c0_83] : memref<2x128xf32, #tpu.memory_space<vmem>>, vector<2x128xf32>
      %c0_84 = arith.constant 0 : index
      %c0_85 = arith.constant 0 : index
      %291 = vector.load %arg8[%c0_84, %c0_85] : memref<2x128xf32, #tpu.memory_space<vmem>>, vector<2x128xf32>
      tpu.vector_store %arg8[%c0_84, %c0_85], %290 {strides = array<i32>} : memref<2x128xf32, #tpu.memory_space<vmem>>, vector<2x128xf32>,
    } else {
    }
    %c0 = arith.constant 0 : index
    %c0_1 = arith.constant 0 : index
    %3 = vector.load %arg4[%c0, %c0_1] : memref<128x384xbf16, #tpu.memory_space<vmem>>, vector<128x384xbf16>
    %c0_2 = arith.constant 0 : index
    %c0_3 = arith.constant 0 : index
    %4 = vector.load %arg5[%c0_2, %c0_3] : memref<1x128xf32, #tpu.memory_space<vmem>>, vector<1x128xf32>
    %c0_4 = arith.constant 0 : index
    %c0_5 = arith.constant 0 : index
    %5 = vector.load %arg8[%c0_4, %c0_5] : memref<2x128xf32, #tpu.memory_space<vmem>>, vector<2x128xf32>
    %c0_6 = arith.constant 0 : index
    %c0_7 = arith.constant 0 : index
    %c0_8 = arith.constant 0 : index
    %6 = vector.load %arg2[%c0_6, %c0_7, %c0_8] : memref<2x8x384xf32, #tpu.memory_space<vmem>>, vector<2x1x384xf32>
    %7 = vector.shape_cast %6 : vector<2x1x384xf32> to vector<2x384xf32>
    %8 = arith.truncf %5 : vector<2x128xf32> to vector<2x128xbf16>
    %cst = arith.constant dense<0.000000e+00> : vector<2x384xf32>
    %9 = tpu.matmul %8, %3, %cst {dimension_numbers = #tpu.dot_dimension_numbers<[1], [0], [0], [1], [0, 0, 1, 1], [], []>} : vector<2x128xbf16>, vector<128x384xbf16>, vector<2x384xf32> -> vector<2x384xf32>
    %10 = vector.extract_strided_slice %7 {offsets = [0, 0], sizes = [2, 128], strides = [1, 1]} : vector<2x384xf32> to vector<2x128xf32>
    %11 = vector.extract_strided_slice %9 {offsets = [0, 0], sizes = [2, 128], strides = [1, 1]} : vector<2x384xf32> to vector<2x128xf32>
    %12 = arith.addf %10, %11 : vector<2x128xf32>
    %13 = arith.negf %12 : vector<2x128xf32>
    %14 = math.exp %13 : vector<2x128xf32>
    %cst_9 = arith.constant 1.000000e+00 : f32
    %15 = vector.broadcast %cst_9 : f32 to vector<2x128xf32>
    %16 = arith.addf %15, %14 : vector<2x128xf32>
    %17 = arith.divf %15, %16 : vector<2x128xf32>
    %18 = vector.extract_strided_slice %7 {offsets = [0, 128], sizes = [2, 128], strides = [1, 1]} : vector<2x384xf32> to vector<2x128xf32>
    %19 = vector.extract_strided_slice %9 {offsets = [0, 128], sizes = [2, 128], strides = [1, 1]} : vector<2x384xf32> to vector<2x128xf32>
    %20 = arith.addf %18, %19 : vector<2x128xf32>
    %21 = arith.negf %20 : vector<2x128xf32>
    %22 = math.exp %21 : vector<2x128xf32>
    %cst_10 = arith.constant 1.000000e+00 : f32
    %23 = vector.broadcast %cst_10 : f32 to vector<2x128xf32>
    %24 = arith.addf %23, %22 : vector<2x128xf32>
    %25 = arith.divf %23, %24 : vector<2x128xf32>
    %26 = vector.extract_strided_slice %7 {offsets = [0, 256], sizes = [2, 128], strides = [1, 1]} : vector<2x384xf32> to vector<2x128xf32>
    %27 = vector.extract_strided_slice %9 {offsets = [0, 256], sizes = [2, 128], strides = [1, 1]} : vector<2x384xf32> to vector<2x128xf32>
    %28 = vector.broadcast %4 : vector<1x128xf32> to vector<2x128xf32>
    %29 = arith.addf %27, %28 : vector<2x128xf32>
    %30 = arith.mulf %17, %29 : vector<2x128xf32>
    %31 = arith.addf %26, %30 : vector<2x128xf32>
    %32 = math.tanh %31 : vector<2x128xf32>
    %33 = arith.mulf %25, %5 : vector<2x128xf32>
    %cst_11 = arith.constant 1.000000e+00 : f32
    %34 = vector.broadcast %cst_11 : f32 to vector<2x128xf32>
    %35 = arith.subf %34, %25 : vector<2x128xf32>
    %36 = arith.mulf %35, %32 : vector<2x128xf32>
    %37 = arith.addf %33, %36 : vector<2x128xf32>
    %c0_12 = arith.constant 0 : index
    %c0_13 = arith.constant 0 : index
    %c0_14 = arith.constant 0 : index
    %38 = vector.load %arg6[%c0_12, %c0_13, %c0_14] : memref<2x8x128xf32, #tpu.memory_space<vmem>>, vector<2x1x128xf32>
    %39 = vector.shape_cast %38 : vector<2x1x128xf32> to vector<2x128xf32>
    %40 = vector.shape_cast %37 : vector<2x128xf32> to vector<2x1x128xf32>
    tpu.vector_store %arg6[%c0_12, %c0_13, %c0_14], %40 {strides = array<i32>} : memref<2x8x128xf32, #tpu.memory_space<vmem>>, vector<2x1x128xf32>,
    %c0_15 = arith.constant 0 : index
    %c1 = arith.constant 1 : index
    %c0_16 = arith.constant 0 : index
    %41 = vector.load %arg2[%c0_15, %c1, %c0_16] : memref<2x8x384xf32, #tpu.memory_space<vmem>>, vector<2x1x384xf32>
    %42 = vector.shape_cast %41 : vector<2x1x384xf32> to vector<2x384xf32>
    %43 = arith.truncf %37 : vector<2x128xf32> to vector<2x128xbf16>
    %cst_17 = arith.constant dense<0.000000e+00> : vector<2x384xf32>
    %44 = tpu.matmul %43, %3, %cst_17 {dimension_numbers = #tpu.dot_dimension_numbers<[1], [0], [0], [1], [0, 0, 1, 1], [], []>} : vector<2x128xbf16>, vector<128x384xbf16>, vector<2x384xf32> -> vector<2x384xf32>
    %45 = vector.extract_strided_slice %42 {offsets = [0, 0], sizes = [2, 128], strides = [1, 1]} : vector<2x384xf32> to vector<2x128xf32>
    %46 = vector.extract_strided_slice %44 {offsets = [0, 0], sizes = [2, 128], strides = [1, 1]} : vector<2x384xf32> to vector<2x128xf32>
    %47 = arith.addf %45, %46 : vector<2x128xf32>
    %48 = arith.negf %47 : vector<2x128xf32>
    %49 = math.exp %48 : vector<2x128xf32>
    %cst_18 = arith.constant 1.000000e+00 : f32
    %50 = vector.broadcast %cst_18 : f32 to vector<2x128xf32>
    %51 = arith.addf %50, %49 : vector<2x128xf32>
    %52 = arith.divf %50, %51 : vector<2x128xf32>
    %53 = vector.extract_strided_slice %42 {offsets = [0, 128], sizes = [2, 128], strides = [1, 1]} : vector<2x384xf32> to vector<2x128xf32>
    %54 = vector.extract_strided_slice %44 {offsets = [0, 128], sizes = [2, 128], strides = [1, 1]} : vector<2x384xf32> to vector<2x128xf32>
    %55 = arith.addf %53, %54 : vector<2x128xf32>
    %56 = arith.negf %55 : vector<2x128xf32>
    %57 = math.exp %56 : vector<2x128xf32>
    %cst_19 = arith.constant 1.000000e+00 : f32
    %58 = vector.broadcast %cst_19 : f32 to vector<2x128xf32>
    %59 = arith.addf %58, %57 : vector<2x128xf32>
    %60 = arith.divf %58, %59 : vector<2x128xf32>
    %61 = vector.extract_strided_slice %42 {offsets = [0, 256], sizes = [2, 128], strides = [1, 1]} : vector<2x384xf32> to vector<2x128xf32>
    %62 = vector.extract_strided_slice %44 {offsets = [0, 256], sizes = [2, 128], strides = [1, 1]} : vector<2x384xf32> to vector<2x128xf32>
    %63 = vector.broadcast %4 : vector<1x128xf32> to vector<2x128xf32>
    %64 = arith.addf %62, %63 : vector<2x128xf32>
    %65 = arith.mulf %52, %64 : vector<2x128xf32>
    %66 = arith.addf %61, %65 : vector<2x128xf32>
    %67 = math.tanh %66 : vector<2x128xf32>
    %68 = arith.mulf %60, %37 : vector<2x128xf32>
    %cst_20 = arith.constant 1.000000e+00 : f32
    %69 = vector.broadcast %cst_20 : f32 to vector<2x128xf32>
    %70 = arith.subf %69, %60 : vector<2x128xf32>
    %71 = arith.mulf %70, %67 : vector<2x128xf32>
    %72 = arith.addf %68, %71 : vector<2x128xf32>
    %c0_21 = arith.constant 0 : index
    %c1_22 = arith.constant 1 : index
    %c0_23 = arith.constant 0 : index
    %73 = vector.load %arg6[%c0_21, %c1_22, %c0_23] : memref<2x8x128xf32, #tpu.memory_space<vmem>>, vector<2x1x128xf32>
    %74 = vector.shape_cast %73 : vector<2x1x128xf32> to vector<2x128xf32>
    %75 = vector.shape_cast %72 : vector<2x128xf32> to vector<2x1x128xf32>
    tpu.vector_store %arg6[%c0_21, %c1_22, %c0_23], %75 {strides = array<i32>} : memref<2x8x128xf32, #tpu.memory_space<vmem>>, vector<2x1x128xf32>,
    %c0_24 = arith.constant 0 : index
    %c2 = arith.constant 2 : index
    %c0_25 = arith.constant 0 : index
    %76 = vector.load %arg2[%c0_24, %c2, %c0_25] : memref<2x8x384xf32, #tpu.memory_space<vmem>>, vector<2x1x384xf32>
    %77 = vector.shape_cast %76 : vector<2x1x384xf32> to vector<2x384xf32>
    %78 = arith.truncf %72 : vector<2x128xf32> to vector<2x128xbf16>
    %cst_26 = arith.constant dense<0.000000e+00> : vector<2x384xf32>
    %79 = tpu.matmul %78, %3, %cst_26 {dimension_numbers = #tpu.dot_dimension_numbers<[1], [0], [0], [1], [0, 0, 1, 1], [], []>} : vector<2x128xbf16>, vector<128x384xbf16>, vector<2x384xf32> -> vector<2x384xf32>
    %80 = vector.extract_strided_slice %77 {offsets = [0, 0], sizes = [2, 128], strides = [1, 1]} : vector<2x384xf32> to vector<2x128xf32>
    %81 = vector.extract_strided_slice %79 {offsets = [0, 0], sizes = [2, 128], strides = [1, 1]} : vector<2x384xf32> to vector<2x128xf32>
    %82 = arith.addf %80, %81 : vector<2x128xf32>
    %83 = arith.negf %82 : vector<2x128xf32>
    %84 = math.exp %83 : vector<2x128xf32>
    %cst_27 = arith.constant 1.000000e+00 : f32
    %85 = vector.broadcast %cst_27 : f32 to vector<2x128xf32>
    %86 = arith.addf %85, %84 : vector<2x128xf32>
    %87 = arith.divf %85, %86 : vector<2x128xf32>
    %88 = vector.extract_strided_slice %77 {offsets = [0, 128], sizes = [2, 128], strides = [1, 1]} : vector<2x384xf32> to vector<2x128xf32>
    %89 = vector.extract_strided_slice %79 {offsets = [0, 128], sizes = [2, 128], strides = [1, 1]} : vector<2x384xf32> to vector<2x128xf32>
    %90 = arith.addf %88, %89 : vector<2x128xf32>
    %91 = arith.negf %90 : vector<2x128xf32>
    %92 = math.exp %91 : vector<2x128xf32>
    %cst_28 = arith.constant 1.000000e+00 : f32
    %93 = vector.broadcast %cst_28 : f32 to vector<2x128xf32>
    %94 = arith.addf %93, %92 : vector<2x128xf32>
    %95 = arith.divf %93, %94 : vector<2x128xf32>
    %96 = vector.extract_strided_slice %77 {offsets = [0, 256], sizes = [2, 128], strides = [1, 1]} : vector<2x384xf32> to vector<2x128xf32>
    %97 = vector.extract_strided_slice %79 {offsets = [0, 256], sizes = [2, 128], strides = [1, 1]} : vector<2x384xf32> to vector<2x128xf32>
    %98 = vector.broadcast %4 : vector<1x128xf32> to vector<2x128xf32>
    %99 = arith.addf %97, %98 : vector<2x128xf32>
    %100 = arith.mulf %87, %99 : vector<2x128xf32>
    %101 = arith.addf %96, %100 : vector<2x128xf32>
    %102 = math.tanh %101 : vector<2x128xf32>
    %103 = arith.mulf %95, %72 : vector<2x128xf32>
    %cst_29 = arith.constant 1.000000e+00 : f32
    %104 = vector.broadcast %cst_29 : f32 to vector<2x128xf32>
    %105 = arith.subf %104, %95 : vector<2x128xf32>
    %106 = arith.mulf %105, %102 : vector<2x128xf32>
    %107 = arith.addf %103, %106 : vector<2x128xf32>
    %c0_30 = arith.constant 0 : index
    %c2_31 = arith.constant 2 : index
    %c0_32 = arith.constant 0 : index
    %108 = vector.load %arg6[%c0_30, %c2_31, %c0_32] : memref<2x8x128xf32, #tpu.memory_space<vmem>>, vector<2x1x128xf32>
    %109 = vector.shape_cast %108 : vector<2x1x128xf32> to vector<2x128xf32>
    %110 = vector.shape_cast %107 : vector<2x128xf32> to vector<2x1x128xf32>
    tpu.vector_store %arg6[%c0_30, %c2_31, %c0_32], %110 {strides = array<i32>} : memref<2x8x128xf32, #tpu.memory_space<vmem>>, vector<2x1x128xf32>,
    %c0_33 = arith.constant 0 : index
    %c3 = arith.constant 3 : index
    %c0_34 = arith.constant 0 : index
    %111 = vector.load %arg2[%c0_33, %c3, %c0_34] : memref<2x8x384xf32, #tpu.memory_space<vmem>>, vector<2x1x384xf32>
    %112 = vector.shape_cast %111 : vector<2x1x384xf32> to vector<2x384xf32>
    %113 = arith.truncf %107 : vector<2x128xf32> to vector<2x128xbf16>
    %cst_35 = arith.constant dense<0.000000e+00> : vector<2x384xf32>
    %114 = tpu.matmul %113, %3, %cst_35 {dimension_numbers = #tpu.dot_dimension_numbers<[1], [0], [0], [1], [0, 0, 1, 1], [], []>} : vector<2x128xbf16>, vector<128x384xbf16>, vector<2x384xf32> -> vector<2x384xf32>
    %115 = vector.extract_strided_slice %112 {offsets = [0, 0], sizes = [2, 128], strides = [1, 1]} : vector<2x384xf32> to vector<2x128xf32>
    %116 = vector.extract_strided_slice %114 {offsets = [0, 0], sizes = [2, 128], strides = [1, 1]} : vector<2x384xf32> to vector<2x128xf32>
    %117 = arith.addf %115, %116 : vector<2x128xf32>
    %118 = arith.negf %117 : vector<2x128xf32>
    %119 = math.exp %118 : vector<2x128xf32>
    %cst_36 = arith.constant 1.000000e+00 : f32
    %120 = vector.broadcast %cst_36 : f32 to vector<2x128xf32>
    %121 = arith.addf %120, %119 : vector<2x128xf32>
    %122 = arith.divf %120, %121 : vector<2x128xf32>
    %123 = vector.extract_strided_slice %112 {offsets = [0, 128], sizes = [2, 128], strides = [1, 1]} : vector<2x384xf32> to vector<2x128xf32>
    %124 = vector.extract_strided_slice %114 {offsets = [0, 128], sizes = [2, 128], strides = [1, 1]} : vector<2x384xf32> to vector<2x128xf32>
    %125 = arith.addf %123, %124 : vector<2x128xf32>
    %126 = arith.negf %125 : vector<2x128xf32>
    %127 = math.exp %126 : vector<2x128xf32>
    %cst_37 = arith.constant 1.000000e+00 : f32
    %128 = vector.broadcast %cst_37 : f32 to vector<2x128xf32>
    %129 = arith.addf %128, %127 : vector<2x128xf32>
    %130 = arith.divf %128, %129 : vector<2x128xf32>
    %131 = vector.extract_strided_slice %112 {offsets = [0, 256], sizes = [2, 128], strides = [1, 1]} : vector<2x384xf32> to vector<2x128xf32>
    %132 = vector.extract_strided_slice %114 {offsets = [0, 256], sizes = [2, 128], strides = [1, 1]} : vector<2x384xf32> to vector<2x128xf32>
    %133 = vector.broadcast %4 : vector<1x128xf32> to vector<2x128xf32>
    %134 = arith.addf %132, %133 : vector<2x128xf32>
    %135 = arith.mulf %122, %134 : vector<2x128xf32>
    %136 = arith.addf %131, %135 : vector<2x128xf32>
    %137 = math.tanh %136 : vector<2x128xf32>
    %138 = arith.mulf %130, %107 : vector<2x128xf32>
    %cst_38 = arith.constant 1.000000e+00 : f32
    %139 = vector.broadcast %cst_38 : f32 to vector<2x128xf32>
    %140 = arith.subf %139, %130 : vector<2x128xf32>
    %141 = arith.mulf %140, %137 : vector<2x128xf32>
    %142 = arith.addf %138, %141 : vector<2x128xf32>
    %c0_39 = arith.constant 0 : index
    %c3_40 = arith.constant 3 : index
    %c0_41 = arith.constant 0 : index
    %143 = vector.load %arg6[%c0_39, %c3_40, %c0_41] : memref<2x8x128xf32, #tpu.memory_space<vmem>>, vector<2x1x128xf32>
    %144 = vector.shape_cast %143 : vector<2x1x128xf32> to vector<2x128xf32>
    %145 = vector.shape_cast %142 : vector<2x128xf32> to vector<2x1x128xf32>
    tpu.vector_store %arg6[%c0_39, %c3_40, %c0_41], %145 {strides = array<i32>} : memref<2x8x128xf32, #tpu.memory_space<vmem>>, vector<2x1x128xf32>,
    %c0_42 = arith.constant 0 : index
    %c4 = arith.constant 4 : index
    %c0_43 = arith.constant 0 : index
    %146 = vector.load %arg2[%c0_42, %c4, %c0_43] : memref<2x8x384xf32, #tpu.memory_space<vmem>>, vector<2x1x384xf32>
    %147 = vector.shape_cast %146 : vector<2x1x384xf32> to vector<2x384xf32>
    %148 = arith.truncf %142 : vector<2x128xf32> to vector<2x128xbf16>
    %cst_44 = arith.constant dense<0.000000e+00> : vector<2x384xf32>
    %149 = tpu.matmul %148, %3, %cst_44 {dimension_numbers = #tpu.dot_dimension_numbers<[1], [0], [0], [1], [0, 0, 1, 1], [], []>} : vector<2x128xbf16>, vector<128x384xbf16>, vector<2x384xf32> -> vector<2x384xf32>
    %150 = vector.extract_strided_slice %147 {offsets = [0, 0], sizes = [2, 128], strides = [1, 1]} : vector<2x384xf32> to vector<2x128xf32>
    %151 = vector.extract_strided_slice %149 {offsets = [0, 0], sizes = [2, 128], strides = [1, 1]} : vector<2x384xf32> to vector<2x128xf32>
    %152 = arith.addf %150, %151 : vector<2x128xf32>
    %153 = arith.negf %152 : vector<2x128xf32>
    %154 = math.exp %153 : vector<2x128xf32>
    %cst_45 = arith.constant 1.000000e+00 : f32
    %155 = vector.broadcast %cst_45 : f32 to vector<2x128xf32>
    %156 = arith.addf %155, %154 : vector<2x128xf32>
    %157 = arith.divf %155, %156 : vector<2x128xf32>
    %158 = vector.extract_strided_slice %147 {offsets = [0, 128], sizes = [2, 128], strides = [1, 1]} : vector<2x384xf32> to vector<2x128xf32>
    %159 = vector.extract_strided_slice %149 {offsets = [0, 128], sizes = [2, 128], strides = [1, 1]} : vector<2x384xf32> to vector<2x128xf32>
    %160 = arith.addf %158, %159 : vector<2x128xf32>
    %161 = arith.negf %160 : vector<2x128xf32>
    %162 = math.exp %161 : vector<2x128xf32>
    %cst_46 = arith.constant 1.000000e+00 : f32
    %163 = vector.broadcast %cst_46 : f32 to vector<2x128xf32>
    %164 = arith.addf %163, %162 : vector<2x128xf32>
    %165 = arith.divf %163, %164 : vector<2x128xf32>
    %166 = vector.extract_strided_slice %147 {offsets = [0, 256], sizes = [2, 128], strides = [1, 1]} : vector<2x384xf32> to vector<2x128xf32>
    %167 = vector.extract_strided_slice %149 {offsets = [0, 256], sizes = [2, 128], strides = [1, 1]} : vector<2x384xf32> to vector<2x128xf32>
    %168 = vector.broadcast %4 : vector<1x128xf32> to vector<2x128xf32>
    %169 = arith.addf %167, %168 : vector<2x128xf32>
    %170 = arith.mulf %157, %169 : vector<2x128xf32>
    %171 = arith.addf %166, %170 : vector<2x128xf32>
    %172 = math.tanh %171 : vector<2x128xf32>
    %173 = arith.mulf %165, %142 : vector<2x128xf32>
    %cst_47 = arith.constant 1.000000e+00 : f32
    %174 = vector.broadcast %cst_47 : f32 to vector<2x128xf32>
    %175 = arith.subf %174, %165 : vector<2x128xf32>
    %176 = arith.mulf %175, %172 : vector<2x128xf32>
    %177 = arith.addf %173, %176 : vector<2x128xf32>
    %c0_48 = arith.constant 0 : index
    %c4_49 = arith.constant 4 : index
    %c0_50 = arith.constant 0 : index
    %178 = vector.load %arg6[%c0_48, %c4_49, %c0_50] : memref<2x8x128xf32, #tpu.memory_space<vmem>>, vector<2x1x128xf32>
    %179 = vector.shape_cast %178 : vector<2x1x128xf32> to vector<2x128xf32>
    %180 = vector.shape_cast %177 : vector<2x128xf32> to vector<2x1x128xf32>
    tpu.vector_store %arg6[%c0_48, %c4_49, %c0_50], %180 {strides = array<i32>} : memref<2x8x128xf32, #tpu.memory_space<vmem>>, vector<2x1x128xf32>,
    %c0_51 = arith.constant 0 : index
    %c5 = arith.constant 5 : index
    %c0_52 = arith.constant 0 : index
    %181 = vector.load %arg2[%c0_51, %c5, %c0_52] : memref<2x8x384xf32, #tpu.memory_space<vmem>>, vector<2x1x384xf32>
    %182 = vector.shape_cast %181 : vector<2x1x384xf32> to vector<2x384xf32>
    %183 = arith.truncf %177 : vector<2x128xf32> to vector<2x128xbf16>
    %cst_53 = arith.constant dense<0.000000e+00> : vector<2x384xf32>
    %184 = tpu.matmul %183, %3, %cst_53 {dimension_numbers = #tpu.dot_dimension_numbers<[1], [0], [0], [1], [0, 0, 1, 1], [], []>} : vector<2x128xbf16>, vector<128x384xbf16>, vector<2x384xf32> -> vector<2x384xf32>
    %185 = vector.extract_strided_slice %182 {offsets = [0, 0], sizes = [2, 128], strides = [1, 1]} : vector<2x384xf32> to vector<2x128xf32>
    %186 = vector.extract_strided_slice %184 {offsets = [0, 0], sizes = [2, 128], strides = [1, 1]} : vector<2x384xf32> to vector<2x128xf32>
    %187 = arith.addf %185, %186 : vector<2x128xf32>
    %188 = arith.negf %187 : vector<2x128xf32>
    %189 = math.exp %188 : vector<2x128xf32>
    %cst_54 = arith.constant 1.000000e+00 : f32
    %190 = vector.broadcast %cst_54 : f32 to vector<2x128xf32>
    %191 = arith.addf %190, %189 : vector<2x128xf32>
    %192 = arith.divf %190, %191 : vector<2x128xf32>
    %193 = vector.extract_strided_slice %182 {offsets = [0, 128], sizes = [2, 128], strides = [1, 1]} : vector<2x384xf32> to vector<2x128xf32>
    %194 = vector.extract_strided_slice %184 {offsets = [0, 128], sizes = [2, 128], strides = [1, 1]} : vector<2x384xf32> to vector<2x128xf32>
    %195 = arith.addf %193, %194 : vector<2x128xf32>
    %196 = arith.negf %195 : vector<2x128xf32>
    %197 = math.exp %196 : vector<2x128xf32>
    %cst_55 = arith.constant 1.000000e+00 : f32
    %198 = vector.broadcast %cst_55 : f32 to vector<2x128xf32>
    %199 = arith.addf %198, %197 : vector<2x128xf32>
    %200 = arith.divf %198, %199 : vector<2x128xf32>
    %201 = vector.extract_strided_slice %182 {offsets = [0, 256], sizes = [2, 128], strides = [1, 1]} : vector<2x384xf32> to vector<2x128xf32>
    %202 = vector.extract_strided_slice %184 {offsets = [0, 256], sizes = [2, 128], strides = [1, 1]} : vector<2x384xf32> to vector<2x128xf32>
    %203 = vector.broadcast %4 : vector<1x128xf32> to vector<2x128xf32>
    %204 = arith.addf %202, %203 : vector<2x128xf32>
    %205 = arith.mulf %192, %204 : vector<2x128xf32>
    %206 = arith.addf %201, %205 : vector<2x128xf32>
    %207 = math.tanh %206 : vector<2x128xf32>
    %208 = arith.mulf %200, %177 : vector<2x128xf32>
    %cst_56 = arith.constant 1.000000e+00 : f32
    %209 = vector.broadcast %cst_56 : f32 to vector<2x128xf32>
    %210 = arith.subf %209, %200 : vector<2x128xf32>
    %211 = arith.mulf %210, %207 : vector<2x128xf32>
    %212 = arith.addf %208, %211 : vector<2x128xf32>
    %c0_57 = arith.constant 0 : index
    %c5_58 = arith.constant 5 : index
    %c0_59 = arith.constant 0 : index
    %213 = vector.load %arg6[%c0_57, %c5_58, %c0_59] : memref<2x8x128xf32, #tpu.memory_space<vmem>>, vector<2x1x128xf32>
    %214 = vector.shape_cast %213 : vector<2x1x128xf32> to vector<2x128xf32>
    %215 = vector.shape_cast %212 : vector<2x128xf32> to vector<2x1x128xf32>
    tpu.vector_store %arg6[%c0_57, %c5_58, %c0_59], %215 {strides = array<i32>} : memref<2x8x128xf32, #tpu.memory_space<vmem>>, vector<2x1x128xf32>,
    %c0_60 = arith.constant 0 : index
    %c6 = arith.constant 6 : index
    %c0_61 = arith.constant 0 : index
    %216 = vector.load %arg2[%c0_60, %c6, %c0_61] : memref<2x8x384xf32, #tpu.memory_space<vmem>>, vector<2x1x384xf32>
    %217 = vector.shape_cast %216 : vector<2x1x384xf32> to vector<2x384xf32>
    %218 = arith.truncf %212 : vector<2x128xf32> to vector<2x128xbf16>
    %cst_62 = arith.constant dense<0.000000e+00> : vector<2x384xf32>
    %219 = tpu.matmul %218, %3, %cst_62 {dimension_numbers = #tpu.dot_dimension_numbers<[1], [0], [0], [1], [0, 0, 1, 1], [], []>} : vector<2x128xbf16>, vector<128x384xbf16>, vector<2x384xf32> -> vector<2x384xf32>
    %220 = vector.extract_strided_slice %217 {offsets = [0, 0], sizes = [2, 128], strides = [1, 1]} : vector<2x384xf32> to vector<2x128xf32>
    %221 = vector.extract_strided_slice %219 {offsets = [0, 0], sizes = [2, 128], strides = [1, 1]} : vector<2x384xf32> to vector<2x128xf32>
    %222 = arith.addf %220, %221 : vector<2x128xf32>
    %223 = arith.negf %222 : vector<2x128xf32>
    %224 = math.exp %223 : vector<2x128xf32>
    %cst_63 = arith.constant 1.000000e+00 : f32
    %225 = vector.broadcast %cst_63 : f32 to vector<2x128xf32>
    %226 = arith.addf %225, %224 : vector<2x128xf32>
    %227 = arith.divf %225, %226 : vector<2x128xf32>
    %228 = vector.extract_strided_slice %217 {offsets = [0, 128], sizes = [2, 128], strides = [1, 1]} : vector<2x384xf32> to vector<2x128xf32>
    %229 = vector.extract_strided_slice %219 {offsets = [0, 128], sizes = [2, 128], strides = [1, 1]} : vector<2x384xf32> to vector<2x128xf32>
    %230 = arith.addf %228, %229 : vector<2x128xf32>
    %231 = arith.negf %230 : vector<2x128xf32>
    %232 = math.exp %231 : vector<2x128xf32>
    %cst_64 = arith.constant 1.000000e+00 : f32
    %233 = vector.broadcast %cst_64 : f32 to vector<2x128xf32>
    %234 = arith.addf %233, %232 : vector<2x128xf32>
    %235 = arith.divf %233, %234 : vector<2x128xf32>
    %236 = vector.extract_strided_slice %217 {offsets = [0, 256], sizes = [2, 128], strides = [1, 1]} : vector<2x384xf32> to vector<2x128xf32>
    %237 = vector.extract_strided_slice %219 {offsets = [0, 256], sizes = [2, 128], strides = [1, 1]} : vector<2x384xf32> to vector<2x128xf32>
    %238 = vector.broadcast %4 : vector<1x128xf32> to vector<2x128xf32>
    %239 = arith.addf %237, %238 : vector<2x128xf32>
    %240 = arith.mulf %227, %239 : vector<2x128xf32>
    %241 = arith.addf %236, %240 : vector<2x128xf32>
    %242 = math.tanh %241 : vector<2x128xf32>
    %243 = arith.mulf %235, %212 : vector<2x128xf32>
    %cst_65 = arith.constant 1.000000e+00 : f32
    %244 = vector.broadcast %cst_65 : f32 to vector<2x128xf32>
    %245 = arith.subf %244, %235 : vector<2x128xf32>
    %246 = arith.mulf %245, %242 : vector<2x128xf32>
    %247 = arith.addf %243, %246 : vector<2x128xf32>
    %c0_66 = arith.constant 0 : index
    %c6_67 = arith.constant 6 : index
    %c0_68 = arith.constant 0 : index
    %248 = vector.load %arg6[%c0_66, %c6_67, %c0_68] : memref<2x8x128xf32, #tpu.memory_space<vmem>>, vector<2x1x128xf32>
    %249 = vector.shape_cast %248 : vector<2x1x128xf32> to vector<2x128xf32>
    %250 = vector.shape_cast %247 : vector<2x128xf32> to vector<2x1x128xf32>
    tpu.vector_store %arg6[%c0_66, %c6_67, %c0_68], %250 {strides = array<i32>} : memref<2x8x128xf32, #tpu.memory_space<vmem>>, vector<2x1x128xf32>,
    %c0_69 = arith.constant 0 : index
    %c7 = arith.constant 7 : index
    %c0_70 = arith.constant 0 : index
    %251 = vector.load %arg2[%c0_69, %c7, %c0_70] : memref<2x8x384xf32, #tpu.memory_space<vmem>>, vector<2x1x384xf32>
    %252 = vector.shape_cast %251 : vector<2x1x384xf32> to vector<2x384xf32>
    %253 = arith.truncf %247 : vector<2x128xf32> to vector<2x128xbf16>
    %cst_71 = arith.constant dense<0.000000e+00> : vector<2x384xf32>
    %254 = tpu.matmul %253, %3, %cst_71 {dimension_numbers = #tpu.dot_dimension_numbers<[1], [0], [0], [1], [0, 0, 1, 1], [], []>} : vector<2x128xbf16>, vector<128x384xbf16>, vector<2x384xf32> -> vector<2x384xf32>
    %255 = vector.extract_strided_slice %252 {offsets = [0, 0], sizes = [2, 128], strides = [1, 1]} : vector<2x384xf32> to vector<2x128xf32>
    %256 = vector.extract_strided_slice %254 {offsets = [0, 0], sizes = [2, 128], strides = [1, 1]} : vector<2x384xf32> to vector<2x128xf32>
    %257 = arith.addf %255, %256 : vector<2x128xf32>
    %258 = arith.negf %257 : vector<2x128xf32>
    %259 = math.exp %258 : vector<2x128xf32>
    %cst_72 = arith.constant 1.000000e+00 : f32
    %260 = vector.broadcast %cst_72 : f32 to vector<2x128xf32>
    %261 = arith.addf %260, %259 : vector<2x128xf32>
    %262 = arith.divf %260, %261 : vector<2x128xf32>
    %263 = vector.extract_strided_slice %252 {offsets = [0, 128], sizes = [2, 128], strides = [1, 1]} : vector<2x384xf32> to vector<2x128xf32>
    %264 = vector.extract_strided_slice %254 {offsets = [0, 128], sizes = [2, 128], strides = [1, 1]} : vector<2x384xf32> to vector<2x128xf32>
    %265 = arith.addf %263, %264 : vector<2x128xf32>
    %266 = arith.negf %265 : vector<2x128xf32>
    %267 = math.exp %266 : vector<2x128xf32>
    %cst_73 = arith.constant 1.000000e+00 : f32
    %268 = vector.broadcast %cst_73 : f32 to vector<2x128xf32>
    %269 = arith.addf %268, %267 : vector<2x128xf32>
    %270 = arith.divf %268, %269 : vector<2x128xf32>
    %271 = vector.extract_strided_slice %252 {offsets = [0, 256], sizes = [2, 128], strides = [1, 1]} : vector<2x384xf32> to vector<2x128xf32>
    %272 = vector.extract_strided_slice %254 {offsets = [0, 256], sizes = [2, 128], strides = [1, 1]} : vector<2x384xf32> to vector<2x128xf32>
    %273 = vector.broadcast %4 : vector<1x128xf32> to vector<2x128xf32>
    %274 = arith.addf %272, %273 : vector<2x128xf32>
    %275 = arith.mulf %262, %274 : vector<2x128xf32>
    %276 = arith.addf %271, %275 : vector<2x128xf32>
    %277 = math.tanh %276 : vector<2x128xf32>
    %278 = arith.mulf %270, %247 : vector<2x128xf32>
    %cst_74 = arith.constant 1.000000e+00 : f32
    %279 = vector.broadcast %cst_74 : f32 to vector<2x128xf32>
    %280 = arith.subf %279, %270 : vector<2x128xf32>
    %281 = arith.mulf %280, %277 : vector<2x128xf32>
    %282 = arith.addf %278, %281 : vector<2x128xf32>
    %c0_75 = arith.constant 0 : index
    %c7_76 = arith.constant 7 : index
    %c0_77 = arith.constant 0 : index
    %283 = vector.load %arg6[%c0_75, %c7_76, %c0_77] : memref<2x8x128xf32, #tpu.memory_space<vmem>>, vector<2x1x128xf32>
    %284 = vector.shape_cast %283 : vector<2x1x128xf32> to vector<2x128xf32>
    %285 = vector.shape_cast %282 : vector<2x128xf32> to vector<2x1x128xf32>
    tpu.vector_store %arg6[%c0_75, %c7_76, %c0_77], %285 {strides = array<i32>} : memref<2x8x128xf32, #tpu.memory_space<vmem>>, vector<2x1x128xf32>,
    %c0_78 = arith.constant 0 : index
    %c0_79 = arith.constant 0 : index
    %286 = vector.load %arg8[%c0_78, %c0_79] : memref<2x128xf32, #tpu.memory_space<vmem>>, vector<2x128xf32>
    tpu.vector_store %arg8[%c0_78, %c0_79], %282 {strides = array<i32>} : memref<2x128xf32, #tpu.memory_space<vmem>>, vector<2x128xf32>,
    %c0_i32_80 = arith.constant 0 : i32
    %287 = arith.cmpi eq, %arg1, %c0_i32_80 : i32
    %288 = arith.extui %287 : i1 to i32
    %c0_i32_81 = arith.constant 0 : i32
    %289 = arith.cmpi ne, %288, %c0_i32_81 : i32
    scf.if %289 {
      %c0_82 = arith.constant 0 : index
      %c0_83 = arith.constant 0 : index
      %290 = vector.load %arg7[%c0_82, %c0_83] : memref<2x128xf32, #tpu.memory_space<vmem>>, vector<2x128xf32>
      tpu.vector_store %arg7[%c0_82, %c0_83], %282 {strides = array<i32>} : memref<2x128xf32, #tpu.memory_space<vmem>>, vector<2x128xf32>,
    } else {
    }
    return
  }
  func.func @transform_0(%arg0: i32, %arg1: i32) -> (i32, i32, i32) {
    %c0_i32 = arith.constant 0 : i32
    %c0_i32_0 = arith.constant 0 : i32
    return %arg0, %arg1, %c0_i32 : i32, i32, i32
  }
  func.func @transform_1(%arg0: i32, %arg1: i32) -> (i32, i32) {
    %c0_i32 = arith.constant 0 : i32
    %c0_i32_0 = arith.constant 0 : i32
    return %arg0, %c0_i32 : i32, i32
  }
  func.func @transform_2(%arg0: i32, %arg1: i32) -> (i32, i32) {
    %c0_i32 = arith.constant 0 : i32
    %c0_i32_0 = arith.constant 0 : i32
    %c0_i32_1 = arith.constant 0 : i32
    return %c0_i32, %c0_i32_0 : i32, i32
  }
  func.func @transform_3(%arg0: i32, %arg1: i32) -> (i32, i32) {
    %c0_i32 = arith.constant 0 : i32
    %c0_i32_0 = arith.constant 0 : i32
    %c0_i32_1 = arith.constant 0 : i32
    return %c0_i32, %c0_i32_0 : i32, i32
  }
  func.func @transform_4(%arg0: i32, %arg1: i32) -> (i32, i32, i32) {
    %c0_i32 = arith.constant 0 : i32
    %c0_i32_0 = arith.constant 0 : i32
    return %arg0, %arg1, %c0_i32 : i32, i32, i32
  }
  func.func @transform_5(%arg0: i32, %arg1: i32) -> (i32, i32) {
    %c0_i32 = arith.constant 0 : i32
    %c0_i32_0 = arith.constant 0 : i32
    return %arg0, %c0_i32 : i32, i32
  }
}

</mosaic_0001>

<llo_original>
// kernel: gru_forward.2
$region0: #{gru_forward.2}
  #allocation0 [shape = 'u32[]', space=smem, size = 0x4, offset = 0x4, fixed_abs, tag = 'smem constant byte address 0x4 - core index']
  #allocation1 [shape = 'u32[144,128]{1,0:T(1,128)}', space=vmem, size = 0x12000, scoped, tag = 'internal scratch']
  #allocation2 [shape = 'f32[16,384]{1,0:T(8,128)}', space=vmem, size = 0x6000, scoped, tag = 'scratch operand']
  %s0 = inlined_call_operand.hbm [shape: f32[16,16], index: 0, kind: input, shape index: {}]
  %s1 = inlined_call_operand.vmem [shape: bf16[16,384], index: 1, kind: input, shape index: {}]
  %s2 = inlined_call_operand.vmem [shape: f32[1,384], index: 2, kind: input, shape index: {}]
  %s3 = inlined_call_operand.vmem [shape: f32[16,384], index: 3, kind: output, shape index: {}]
  %s4 = sld [smem:[#allocation0]]
  $region34: #{gru_forward.2} parent=0
    _
  %s6 = ssub.s32 1, %s4
  %s7 = scalar_select 0, %s6, %s4
  $region1: #{gru_forward.2} parent=0
    #allocation3 [shape = 'u8[8192]{0}', space=vmem, size = 0x2000, scoped, tag = 'input window, operand 0, single buffered']
    #allocation4 [shape = 's32[1]{0}', space=sflag, size = 0x4, scoped, tag = 'scoped memory for gru_forward.2']
    %8 = vsyncpa [#allocation4], 0
    // Predicated region
    $region2: #{gru_forward.2} parent=1 // pred_check
      _
    $region3: #{gru_forward.2} parent=1 // pred_check_branch
      %10 = sbr.rel (0) target = $region5
    $region4: #{gru_forward.2} parent=1 // pred_region
      %s12 = ssub.s32 256, 256
      %13 = vsyncadd [#allocation4], %s12
      %s14 = sshll.u32 [#allocation3], 4
      %s15 = int_to_ptr.vmem [resolvable:$true] %s14
      %20 = dma.hbm_to_vmem [thread:$0]  %s0, 256, %s15, [#allocation4], 128, 128, 8
    $region5: #{gru_forward.2} parent=1 // pred_fallthru
      _
    // Predicated region
    $region6: #{gru_forward.2} parent=1 // pred_check
      _
    $region7: #{gru_forward.2} parent=1 // pred_check_branch
      %22 = sbr.rel (0) target = $region9
    $region8: #{gru_forward.2} parent=1 // pred_region
      _
    $region9: #{gru_forward.2} parent=1 // pred_fallthru
      _
    // Predicated region
    $region10: #{gru_forward.2} parent=1 // pred_check
      _
    $region11: #{gru_forward.2} parent=1 // pred_check_branch
      %24 = sbr.rel (0) target = $region13
    $region12: #{gru_forward.2} parent=1 // pred_region
      _
    $region13: #{gru_forward.2} parent=1 // pred_fallthru
      _
    // Predicated region
    $region14: #{gru_forward.2} parent=1 // pred_check
      _
    $region15: #{gru_forward.2} parent=1 // pred_check_branch
      %26 = sbr.rel (0) target = $region17
    $region16: #{gru_forward.2} parent=1 // pred_region
      %27 = dma.done [#allocation4], 256
    $region17: #{gru_forward.2} parent=1 // pred_fallthru
      _
    %p29 = scmp.eq.s32.totalorder 0, 0
    // Predicated region
    $region18: #{gru_forward.2} parent=1 // pred_check
      %p30 = pneg %p29
    $region19: #{gru_forward.2} parent=1 // pred_check_branch
      %32 = sbr.rel (%p30) target = $region21
    $region20: #{gru_forward.2} parent=1 // pred_region
      %v33 = vld [vmem:[%s2] sm:$0x7]
      %v35 = vlaneseq
      %v36 = vshrl.u32 %v35, 7
      %v37 = vsub.s32 0, %v36
      %v38 = vrot.slane %v33, %v37
      %v39 = vlaneseq
      %v40 = vshrl.u32 %v39, 7
      %v41 = vsub.s32 1, %v40
      %v42 = vrot.slane %v33, %v41
      %v43 = vlaneseq
      %v44 = vshrl.u32 %v43, 7
      %v45 = vsub.s32 2, %v44
      %v46 = vrot.slane %v33, %v45
      %50 = vst [vmem:[#allocation2] sm:$0xff] %v38
      %51 = vst [vmem:[#allocation2 + $0x8] sm:$0xff] %v42
      %52 = vst [vmem:[#allocation2 + $0x10] sm:$0xff] %v46
      %53 = vst [vmem:[#allocation2 + $0x18] sm:$0xff] %v38
      %54 = vst [vmem:[#allocation2 + $0x20] sm:$0xff] %v42
      %55 = vst [vmem:[#allocation2 + $0x28] sm:$0xff] %v46
    $region21: #{gru_forward.2} parent=1 // pred_fallthru
      _
    %v56 = vld [vmem:[#allocation2] sm:$0xff]
    %v57 = vld [vmem:[#allocation2 + $0x8] sm:$0xff]
    %v58 = vld [vmem:[#allocation2 + $0x10] sm:$0xff]
    %v59 = vld [vmem:[#allocation2 + $0x18] sm:$0xff]
    %v60 = vld [vmem:[#allocation2 + $0x20] sm:$0xff]
    %v61 = vld [vmem:[#allocation2 + $0x28] sm:$0xff]
    %v62 = vld [vmem:[#allocation3] sm:$0xff]
    %v63 = vld [vmem:[#allocation3 + $0x8] sm:$0xff]
    %v64 = vpack.c.bf16 %v63, %v62
    %v65 = vld [vmem:[%s1] sm:$0xff]
    %v66 = vld [vmem:[%s1 + $0x8] sm:$0xf]
    %v67 = vld [vmem:[%s1 + $0xc] sm:$0xff]
    %v68 = vld [vmem:[%s1 + $0x14] sm:$0xf]
    %v73 = vunpack.c.l.b16 %v65
    %v74 = vunpack.c.h.b16 %v65
    %v75 = vunpack.c.l.b16 %v66
    %v76 = vunpack.c.l.b16 %v67
    %v77 = vunpack.c.h.b16 %v67
    %v78 = vunpack.c.l.b16 %v68
    %v79 = vpack.c.b16 %v76, %v73
    %v80 = vpack.c.b16 %v77, %v74
    %v81 = vpack.c.b16 %v78, %v75
    %vm85 = vcmask 130048
    %v87 = vsel %vm85, %v64, 0
    %89 = vmatprep.subr.bf16.mxu0 %v80
    %90 = vmatpush1.bf16.msra.mxu0 %v79
    %91 = vmatprep.subr.bf16.mxu0 0
    %92 = vmatpush1.bf16.msra.mxu0 0
    %93 = vmatprep.subr.bf16.mxu0 0
    %94 = vmatpush1.bf16.msra.mxu0 0
    %95 = vmatprep.subr.bf16.mxu0 0
    %96 = vmatpush1.bf16.msra.mxu0 0
    %97 = vmatprep.subr.bf16.mxu0 0
    %98 = vmatpush1.bf16.msra.mxu0 0
    %99 = vmatprep.subr.bf16.mxu0 0
    %100 = vmatpush1.bf16.msra.mxu0 0
    %101 = vmatprep.subr.bf16.mxu0 0
    %102 = vmatpush1.bf16.msra.mxu0 0
    %103 = vmatprep.subr.bf16.mxu0 0
    %104 = vmatpush1.bf16.msra.mxu0 0
    %105 = vmatprep.subr.bf16.mxu0 0
    %106 = vmatpush1.bf16.msra.mxu0 0
    %107 = vmatprep.subr.bf16.mxu0 0
    %108 = vmatpush1.bf16.msra.mxu0 0
    %109 = vmatprep.subr.bf16.mxu0 0
    %110 = vmatpush1.bf16.msra.mxu0 0
    %111 = vmatprep.subr.bf16.mxu0 0
    %112 = vmatpush1.bf16.msra.mxu0 0
    %113 = vmatprep.subr.bf16.mxu0 0
    %114 = vmatpush1.bf16.msra.mxu0 0
    %115 = vmatprep.subr.bf16.mxu0 0
    %116 = vmatpush1.bf16.msra.mxu0 0
    %117 = vmatprep.subr.bf16.mxu0 0
    %118 = vmatpush1.bf16.msra.mxu0 0
    %119 = vmatprep.subr.bf16.mxu0 0
    %120 = vmatpush1.bf16.msra.mxu0 0
    %121 = vmatprep.mubr.bf16.mxu0 0
    %122 = vmatmul.mubr.bf16.gmra.mrb[0].mxu0 %v87
    %v123 = vpop.f32.mrb[0].mxu0
    %v124 = vadd.f32 0.0, %v123
    %v125 = vpop.f32.mrb[0].mxu0
    %v126 = vadd.f32 0.0, %v125
    %v127 = vpop.f32.mrb[0].mxu0
    %v128 = vadd.f32 0.0, %v127
    %v129 = vpop.f32.mrb[0].mxu0
    %v130 = vadd.f32 0.0, %v129
    %131 = vdwg.mxu0
    %132 = vmatprep.subr.bf16.mxu0 0
    %133 = vmatpush1.bf16.msra.mxu0 %v81
    %134 = vmatprep.subr.bf16.mxu0 0
    %135 = vmatpush1.bf16.msra.mxu0 0
    %136 = vmatprep.subr.bf16.mxu0 0
    %137 = vmatpush1.bf16.msra.mxu0 0
    %138 = vmatprep.subr.bf16.mxu0 0
    %139 = vmatpush1.bf16.msra.mxu0 0
    %140 = vmatprep.subr.bf16.mxu0 0
    %141 = vmatpush1.bf16.msra.mxu0 0
    %142 = vmatprep.subr.bf16.mxu0 0
    %143 = vmatpush1.bf16.msra.mxu0 0
    %144 = vmatprep.subr.bf16.mxu0 0
    %145 = vmatpush1.bf16.msra.mxu0 0
    %146 = vmatprep.subr.bf16.mxu0 0
    %147 = vmatpush1.bf16.msra.mxu0 0
    %148 = vmatprep.subr.bf16.mxu0 0
    %149 = vmatpush1.bf16.msra.mxu0 0
    %150 = vmatprep.subr.bf16.mxu0 0
    %151 = vmatpush1.bf16.msra.mxu0 0
    %152 = vmatprep.subr.bf16.mxu0 0
    %153 = vmatpush1.bf16.msra.mxu0 0
    %154 = vmatprep.subr.bf16.mxu0 0
    %155 = vmatpush1.bf16.msra.mxu0 0
    %156 = vmatprep.subr.bf16.mxu0 0
    %157 = vmatpush1.bf16.msra.mxu0 0
    %158 = vmatprep.subr.bf16.mxu0 0
    %159 = vmatpush1.bf16.msra.mxu0 0
    %160 = vmatprep.subr.bf16.mxu0 0
    %161 = vmatpush1.bf16.msra.mxu0 0
    %162 = vmatprep.subr.bf16.mxu0 0
    %163 = vmatpush1.bf16.msra.mxu0 0
    %164 = vmatprep.mubr.bf16.mxu0 0
    %165 = vmatmul.mubr.bf16.gmra.mrb[0].mxu0 %v87
    %v166 = vpop.f32.mrb[0].mxu0
    %v167 = vadd.f32 0.0, %v166
    %v168 = vpop.f32.mrb[0].mxu0
    %v169 = vpop.f32.mrb[0].mxu0
    %v170 = vadd.f32 0.0, %v169
    %v171 = vpop.f32.mrb[0].mxu0
    %172 = vdwg.mxu0
    %v173 = vadd.f32 %v56, %v124
    %v174 = vadd.f32 %v57, %v126
    %v175 = vadd.f32 %v58, %v167
    %v176 = vadd.f32 %v59, %v128
    %v177 = vadd.f32 %v60, %v130
    %v178 = vadd.f32 %v61, %v170
    %179 = vst [vmem:[#allocation2] sm:$0xff] %v173
    %180 = vst [vmem:[#allocation2 + $0x8] sm:$0xff] %v174
    %181 = vst [vmem:[#allocation2 + $0x10] sm:$0xff] %v175
    %182 = vst [vmem:[#allocation2 + $0x18] sm:$0xff] %v176
    %183 = vst [vmem:[#allocation2 + $0x20] sm:$0xff] %v177
    %184 = vst [vmem:[#allocation2 + $0x28] sm:$0xff] %v178
    // Predicated region
    $region22: #{gru_forward.2} parent=1 // pred_check
      %p185 = pneg %p29
    $region23: #{gru_forward.2} parent=1 // pred_check_branch
      %187 = sbr.rel (%p185) target = $region25
    $region24: #{gru_forward.2} parent=1 // pred_region
      %v188 = vld [vmem:[#allocation2] sm:$0xff]
      %v189 = vld [vmem:[#allocation2 + $0x8] sm:$0xff]
      %v190 = vld [vmem:[#allocation2 + $0x10] sm:$0xff]
      %v191 = vld [vmem:[#allocation2 + $0x18] sm:$0xff]
      %v192 = vld [vmem:[#allocation2 + $0x20] sm:$0xff]
      %v193 = vld [vmem:[#allocation2 + $0x28] sm:$0xff]
      %194 = vst [vmem:[%s3] sm:$0xff] %v188
      %195 = vst [vmem:[%s3 + $0x8] sm:$0xff] %v189
      %196 = vst [vmem:[%s3 + $0x10] sm:$0xff] %v190
      %197 = vst [vmem:[%s3 + $0x18] sm:$0xff] %v191
      %198 = vst [vmem:[%s3 + $0x20] sm:$0xff] %v192
      %199 = vst [vmem:[%s3 + $0x28] sm:$0xff] %v193
    $region25: #{gru_forward.2} parent=1 // pred_fallthru
      _
    // Predicated region
    $region26: #{gru_forward.2} parent=1 // pred_check
      _
    $region27: #{gru_forward.2} parent=1 // pred_check_branch
      %201 = sbr.rel (0) target = $region29
    $region28: #{gru_forward.2} parent=1 // pred_region
      _
    $region29: #{gru_forward.2} parent=1 // pred_fallthru
      _
    // Predicated region
    $region30: #{gru_forward.2} parent=1 // pred_check
      _
    $region31: #{gru_forward.2} parent=1 // pred_check_branch
      %203 = sbr.rel (0) target = $region33
    $region32: #{gru_forward.2} parent=1 // pred_region
      _
    $region33: #{gru_forward.2} parent=1 // pred_fallthru
      _
    %204 = vsyncpa [#allocation4], 1

// kernel: gru_forward.3
$region0: #{gru_forward.3}
  #allocation0 [shape = 'u32[]', space=smem, size = 0x4, offset = 0x4, fixed_abs, tag = 'smem constant byte address 0x4 - core index']
  #allocation1 [shape = 'u32[144,128]{1,0:T(1,128)}', space=vmem, size = 0x12000, scoped, tag = 'internal scratch']
  #allocation2 [shape = 'f32[2,128]{1,0:T(2,128)}', space=vmem, size = 0x400, scoped, tag = 'scratch operand']
  %s0 = inlined_call_operand.vmem [shape: f32[2,8,384], index: 0, kind: input, shape index: {}]
  %s1 = inlined_call_operand.vmem [shape: f32[2,128], index: 1, kind: input, shape index: {}]
  %s2 = inlined_call_operand.hbm [shape: bf16[128,384], index: 2, kind: input, shape index: {}]
  %s3 = inlined_call_operand.vmem [shape: f32[1,128], index: 3, kind: input, shape index: {}]
  %s4 = inlined_call_operand.hbm [shape: f32[2,8,128], index: 4, kind: output, shape index: {0}]
  %s5 = inlined_call_operand.hbm [shape: f32[2,128], index: 5, kind: output, shape index: {1}]
  %6 = xla_tuple %s4, %s5
  %s7 = sld [smem:[#allocation0]]
  $region46: #{gru_forward.3} parent=0
    _
  %s9 = ssub.s32 1, %s7
  %s10 = scalar_select 0, %s9, %s7
  $region1: #{gru_forward.3} parent=0
    #allocation3 [shape = 'u8[98304]{0}', space=vmem, size = 0x18000, scoped, tag = 'input window, operand 2, single buffered']
    #allocation4 [shape = 's32[1]{0}', space=sflag, size = 0x4, scoped, tag = 'scoped memory for gru_forward.3']
    #allocation5 [shape = 's32[1]{0}', space=sflag, size = 0x4, scoped, tag = 'scoped memory for gru_forward.3']
    #allocation6 [shape = 'u8[8192]{0}', space=vmem, size = 0x2000, scoped, tag = 'output window, operand 0, single buffered']
    #allocation7 [shape = 'u8[1024]{0}', space=vmem, size = 0x400, scoped, tag = 'output window, operand 1, single buffered']
    #allocation8 [shape = 's32[1]{0}', space=sflag, size = 0x4, scoped, tag = 'scoped memory for gru_forward.3']
    %11 = vsyncpa [#allocation4], 0
    %12 = vsyncpa [#allocation5], 0
    %13 = vsyncpa [#allocation8], 0
    // Predicated region
    $region2: #{gru_forward.3} parent=1 // pred_check
      _
    $region3: #{gru_forward.3} parent=1 // pred_check_branch
      %15 = sbr.rel (0) target = $region5
    $region4: #{gru_forward.3} parent=1 // pred_region
      _
    $region5: #{gru_forward.3} parent=1 // pred_fallthru
      _
    // Predicated region
    $region6: #{gru_forward.3} parent=1 // pred_check
      _
    $region7: #{gru_forward.3} parent=1 // pred_check_branch
      %17 = sbr.rel (0) target = $region9
    $region8: #{gru_forward.3} parent=1 // pred_region
      _
    $region9: #{gru_forward.3} parent=1 // pred_fallthru
      _
    // Predicated region
    $region10: #{gru_forward.3} parent=1 // pred_check
      _
    $region11: #{gru_forward.3} parent=1 // pred_check_branch
      %19 = sbr.rel (0) target = $region13
    $region12: #{gru_forward.3} parent=1 // pred_region
      %s21 = ssub.s32 3072, 3072
      %22 = vsyncadd [#allocation4], %s21
      %s23 = sshll.u32 [#allocation3], 4
      %s24 = int_to_ptr.vmem [resolvable:$true] %s23
      %29 = dma.hbm_to_vmem [thread:$0]  %s2, 3072, %s24, [#allocation4], 192, 192, 12
    $region13: #{gru_forward.3} parent=1 // pred_fallthru
      _
    // Predicated region
    $region14: #{gru_forward.3} parent=1 // pred_check
      _
    $region15: #{gru_forward.3} parent=1 // pred_check_branch
      %31 = sbr.rel (0) target = $region17
    $region16: #{gru_forward.3} parent=1 // pred_region
      _
    $region17: #{gru_forward.3} parent=1 // pred_fallthru
      _
    // Predicated region
    $region18: #{gru_forward.3} parent=1 // pred_check
      _
    $region19: #{gru_forward.3} parent=1 // pred_check_branch
      %33 = sbr.rel (0) target = $region21
    $region20: #{gru_forward.3} parent=1 // pred_region
      %34 = dma.done [#allocation4], 3072
    $region21: #{gru_forward.3} parent=1 // pred_fallthru
      _
    %p36 = scmp.eq.s32.totalorder 0, 0
    // Predicated region
    $region22: #{gru_forward.3} parent=1 // pred_check
      %p37 = pneg %p36
    $region23: #{gru_forward.3} parent=1 // pred_check_branch
      %39 = sbr.rel (%p37) target = $region25
    $region24: #{gru_forward.3} parent=1 // pred_region
      %v40 = vld [vmem:[%s1] sm:$0x3]
      %41 = vst [vmem:[#allocation2] sm:$0x3] %v40
    $region25: #{gru_forward.3} parent=1 // pred_fallthru
      _
    %v42 = vld [vmem:[#allocation3] sm:$0xff]
    %v43 = vld [vmem:[#allocation3 + $0x8] sm:$0xf]
    %v44 = vld [vmem:[#allocation3 + $0xc] sm:$0xff]
    %v45 = vld [vmem:[#allocation3 + $0x14] sm:$0xf]
    %v46 = vld [vmem:[#allocation3 + $0x18] sm:$0xff]
    %v47 = vld [vmem:[#allocation3 + $0x20] sm:$0xf]
    %v48 = vld [vmem:[#allocation3 + $0x24] sm:$0xff]
    %v49 = vld [vmem:[#allocation3 + $0x2c] sm:$0xf]
    %v50 = vld [vmem:[#allocation3 + $0x30] sm:$0xff]
    %v51 = vld [vmem:[#allocation3 + $0x38] sm:$0xf]
    %v52 = vld [vmem:[#allocation3 + $0x3c] sm:$0xff]
    %v53 = vld [vmem:[#allocation3 + $0x44] sm:$0xf]
    %v54 = vld [vmem:[#allocation3 + $0x48] sm:$0xff]
    %v55 = vld [vmem:[#allocation3 + $0x50] sm:$0xf]
    %v56 = vld [vmem:[#allocation3 + $0x54] sm:$0xff]
    %v57 = vld [vmem:[#allocation3 + $0x5c] sm:$0xf]
    %v58 = vld [vmem:[#allocation3 + $0x60] sm:$0xff]
    %v59 = vld [vmem:[#allocation3 + $0x68] sm:$0xf]
    %v60 = vld [vmem:[#allocation3 + $0x6c] sm:$0xff]
    %v61 = vld [vmem:[#allocation3 + $0x74] sm:$0xf]
    %v62 = vld [vmem:[#allocation3 + $0x78] sm:$0xff]
    %v63 = vld [vmem:[#allocation3 + $0x80] sm:$0xf]
    %v64 = vld [vmem:[#allocation3 + $0x84] sm:$0xff]
    %v65 = vld [vmem:[#allocation3 + $0x8c] sm:$0xf]
    %v66 = vld [vmem:[#allocation3 + $0x90] sm:$0xff]
    %v67 = vld [vmem:[#allocation3 + $0x98] sm:$0xf]
    %v68 = vld [vmem:[#allocation3 + $0x9c] sm:$0xff]
    %v69 = vld [vmem:[#allocation3 + $0xa4] sm:$0xf]
    %v70 = vld [vmem:[#allocation3 + $0xa8] sm:$0xff]
    %v71 = vld [vmem:[#allocation3 + $0xb0] sm:$0xf]
    %v72 = vld [vmem:[#allocation3 + $0xb4] sm:$0xff]
    %v73 = vld [vmem:[#allocation3 + $0xbc] sm:$0xf]
    %v74 = vld [vmem:[%s3] sm:$0x1]
    %v75 = vld [vmem:[#allocation2] sm:$0x3]
    %v76 = vld [vmem:[%s0] ss:$8 sm:$0x7]
    %s77 = scalar_lea.vmem %s0, 24
    %v78 = vld [vmem:[%s77] ss:$8 sm:$0x7]
    %v79 = vpack.c.bf16 %v75, %v75
    %v112 = vunpack.c.l.b16 %v42
    %v113 = vunpack.c.h.b16 %v42
    %v114 = vunpack.c.l.b16 %v43
    %v115 = vunpack.c.l.b16 %v44
    %v116 = vunpack.c.h.b16 %v44
    %v117 = vunpack.c.l.b16 %v45
    %v118 = vunpack.c.l.b16 %v46
    %v119 = vunpack.c.h.b16 %v46
    %v120 = vunpack.c.l.b16 %v47
    %v121 = vunpack.c.l.b16 %v48
    %v122 = vunpack.c.h.b16 %v48
    %v123 = vunpack.c.l.b16 %v49
    %v124 = vunpack.c.l.b16 %v50
    %v125 = vunpack.c.h.b16 %v50
    %v126 = vunpack.c.l.b16 %v51
    %v127 = vunpack.c.l.b16 %v52
    %v128 = vunpack.c.h.b16 %v52
    %v129 = vunpack.c.l.b16 %v53
    %v130 = vunpack.c.l.b16 %v54
    %v131 = vunpack.c.h.b16 %v54
    %v132 = vunpack.c.l.b16 %v55
    %v133 = vunpack.c.l.b16 %v56
    %v134 = vunpack.c.h.b16 %v56
    %v135 = vunpack.c.l.b16 %v57
    %v136 = vunpack.c.l.b16 %v58
    %v137 = vunpack.c.h.b16 %v58
    %v138 = vunpack.c.l.b16 %v59
    %v139 = vunpack.c.l.b16 %v60
    %v140 = vunpack.c.h.b16 %v60
    %v141 = vunpack.c.l.b16 %v61
    %v142 = vunpack.c.l.b16 %v62
    %v143 = vunpack.c.h.b16 %v62
    %v144 = vunpack.c.l.b16 %v63
    %v145 = vunpack.c.l.b16 %v64
    %v146 = vunpack.c.h.b16 %v64
    %v147 = vunpack.c.l.b16 %v65
    %v148 = vunpack.c.l.b16 %v66
    %v149 = vunpack.c.h.b16 %v66
    %v150 = vunpack.c.l.b16 %v67
    %v151 = vunpack.c.l.b16 %v68
    %v152 = vunpack.c.h.b16 %v68
    %v153 = vunpack.c.l.b16 %v69
    %v154 = vunpack.c.l.b16 %v70
    %v155 = vunpack.c.h.b16 %v70
    %v156 = vunpack.c.l.b16 %v71
    %v157 = vunpack.c.l.b16 %v72
    %v158 = vunpack.c.h.b16 %v72
    %v159 = vunpack.c.l.b16 %v73
    %v160 = vpack.c.b16 %v115, %v112
    %v161 = vpack.c.b16 %v116, %v113
    %v162 = vpack.c.b16 %v117, %v114
    %v163 = vpack.c.b16 %v121, %v118
    %v164 = vpack.c.b16 %v122, %v119
    %v165 = vpack.c.b16 %v123, %v120
    %v166 = vpack.c.b16 %v127, %v124
    %v167 = vpack.c.b16 %v128, %v125
    %v168 = vpack.c.b16 %v129, %v126
    %v169 = vpack.c.b16 %v133, %v130
    %v170 = vpack.c.b16 %v134, %v131
    %v171 = vpack.c.b16 %v135, %v132
    %v172 = vpack.c.b16 %v139, %v136
    %v173 = vpack.c.b16 %v140, %v137
    %v174 = vpack.c.b16 %v141, %v138
    %v175 = vpack.c.b16 %v145, %v142
    %v176 = vpack.c.b16 %v146, %v143
    %v177 = vpack.c.b16 %v147, %v144
    %v178 = vpack.c.b16 %v151, %v148
    %v179 = vpack.c.b16 %v152, %v149
    %v180 = vpack.c.b16 %v153, %v150
    %v181 = vpack.c.b16 %v157, %v154
    %v182 = vpack.c.b16 %v158, %v155
    %v183 = vpack.c.b16 %v159, %v156
    %208 = vmatprep.subr.bf16.mxu0 %v161
    %209 = vmatpush1.bf16.msra.mxu0 %v160
    %210 = vmatprep.subr.bf16.mxu0 %v164
    %211 = vmatpush1.bf16.msra.mxu0 %v163
    %212 = vmatprep.subr.bf16.mxu0 %v167
    %213 = vmatpush1.bf16.msra.mxu0 %v166
    %214 = vmatprep.subr.bf16.mxu0 %v170
    %215 = vmatpush1.bf16.msra.mxu0 %v169
    %216 = vmatprep.subr.bf16.mxu0 %v173
    %217 = vmatpush1.bf16.msra.mxu0 %v172
    %218 = vmatprep.subr.bf16.mxu0 %v176
    %219 = vmatpush1.bf16.msra.mxu0 %v175
    %220 = vmatprep.subr.bf16.mxu0 %v179
    %221 = vmatpush1.bf16.msra.mxu0 %v178
    %222 = vmatprep.subr.bf16.mxu0 %v182
    %223 = vmatpush1.bf16.msra.mxu0 %v181
    %224 = vmatprep.subr.bf16.mxu0 0
    %225 = vmatpush1.bf16.msra.mxu0 0
    %226 = vmatprep.subr.bf16.mxu0 0
    %227 = vmatpush1.bf16.msra.mxu0 0
    %228 = vmatprep.subr.bf16.mxu0 0
    %229 = vmatpush1.bf16.msra.mxu0 0
    %230 = vmatprep.subr.bf16.mxu0 0
    %231 = vmatpush1.bf16.msra.mxu0 0
    %232 = vmatprep.subr.bf16.mxu0 0
    %233 = vmatpush1.bf16.msra.mxu0 0
    %234 = vmatprep.subr.bf16.mxu0 0
    %235 = vmatpush1.bf16.msra.mxu0 0
    %236 = vmatprep.subr.bf16.mxu0 0
    %237 = vmatpush1.bf16.msra.mxu0 0
    %238 = vmatprep.subr.bf16.mxu0 0
    %239 = vmatpush1.bf16.msra.mxu0 0
    %240 = vmatprep.mubr.bf16.mxu0 0
    %241 = vmatmul.mubr.bf16.gmra.mrb[0].mxu0 %v79
    %v242 = vpop.f32.mrb[0].mxu0
    %v243 = vadd.f32 0.0, %v242
    %v244 = vpop.f32.mrb[0].mxu0
    %v245 = vadd.f32 0.0, %v244
    %v246 = vpop.f32.mrb[0].mxu0
    %v247 = vpop.f32.mrb[0].mxu0
    %248 = vdwg.mxu0
    %249 = vmatprep.subr.bf16.mxu0 0
    %250 = vmatpush1.bf16.msra.mxu0 %v162
    %251 = vmatprep.subr.bf16.mxu0 0
    %252 = vmatpush1.bf16.msra.mxu0 %v165
    %253 = vmatprep.subr.bf16.mxu0 0
    %254 = vmatpush1.bf16.msra.mxu0 %v168
    %255 = vmatprep.subr.bf16.mxu0 0
    %256 = vmatpush1.bf16.msra.mxu0 %v171
    %257 = vmatprep.subr.bf16.mxu0 0
    %258 = vmatpush1.bf16.msra.mxu0 %v174
    %259 = vmatprep.subr.bf16.mxu0 0
    %260 = vmatpush1.bf16.msra.mxu0 %v177
    %261 = vmatprep.subr.bf16.mxu0 0
    %262 = vmatpush1.bf16.msra.mxu0 %v180
    %263 = vmatprep.subr.bf16.mxu0 0
    %264 = vmatpush1.bf16.msra.mxu0 %v183
    %265 = vmatprep.subr.bf16.mxu0 0
    %266 = vmatpush1.bf16.msra.mxu0 0
    %267 = vmatprep.subr.bf16.mxu0 0
    %268 = vmatpush1.bf16.msra.mxu0 0
    %269 = vmatprep.subr.bf16.mxu0 0
    %270 = vmatpush1.bf16.msra.mxu0 0
    %271 = vmatprep.subr.bf16.mxu0 0
    %272 = vmatpush1.bf16.msra.mxu0 0
    %273 = vmatprep.subr.bf16.mxu0 0
    %274 = vmatpush1.bf16.msra.mxu0 0
    %275 = vmatprep.subr.bf16.mxu0 0
    %276 = vmatpush1.bf16.msra.mxu0 0
    %277 = vmatprep.subr.bf16.mxu0 0
    %278 = vmatpush1.bf16.msra.mxu0 0
    %279 = vmatprep.subr.bf16.mxu0 0
    %280 = vmatpush1.bf16.msra.mxu0 0
    %281 = vmatprep.mubr.bf16.mxu0 0
    %282 = vmatmul.mubr.bf16.gmra.mrb[0].mxu0 %v79
    %v283 = vpop.f32.mrb[0].mxu0
    %v284 = vadd.f32 0.0, %v283
    %v285 = vpop.f32.mrb[0].mxu0
    %v286 = vpop.f32.mrb[0].mxu0
    %v287 = vpop.f32.mrb[0].mxu0
    %288 = vdwg.mxu0
    %v291 = vunpack.c.l.s4 1966171168
    %v292 = vunpack.c.0.s8 %v291
    %v293 = vlaneseq
    %v294 = vshrl.u32 %v293, 7
    %v295 = vsub.s32 %v292, %v294
    %v296 = vrot.slane %v243, %v295
    %v297 = vcombine.high %v296, %v296
    %v299 = vunpack.c.l.s4 1966171168
    %v300 = vunpack.c.0.s8 %v299
    %v301 = vlaneseq
    %v302 = vshrl.u32 %v301, 7
    %v303 = vsub.s32 %v300, %v302
    %v304 = vrot.slane %v296, %v303
    %v306 = vunpack.c.l.s4 1966171168
    %v307 = vunpack.c.0.s8 %v306
    %v308 = vlaneseq
    %v309 = vshrl.u32 %v308, 7
    %v310 = vsub.s32 %v307, %v309
    %v311 = vrot.slane %v297, %v310
    %v314 = vadd.f32 %v76, %v304
    %v315 = vadd.f32 %v78, %v311
    %v316 = vxor.u32 %v314, 2147483648
    %v317 = vxor.u32 %v315, 2147483648
    %v318 = vmul.f32 %v316, 1.442695
    %v319 = vpow.pop %v318
    %v320 = vmul.f32 %v317, 1.442695
    %v321 = vpow.pop %v320
    %v322 = vadd.f32 %v319, 1.0
    %v323 = vadd.f32 %v321, 1.0
    %v324 = vrcp.pop %v322
    %v325 = vmul.f32 1.0, %v324
    %v326 = vrcp.pop %v323
    %v327 = vmul.f32 1.0, %v326
    %v330 = vrot.slane %v76, 1
    %v331 = vrot.slane %v78, 1
    %v336 = vunpack.c.l.s4 1966171168
    %v337 = vunpack.c.0.s8 %v336
    %v338 = vlaneseq
    %v339 = vshrl.u32 %v338, 7
    %v340 = vsub.s32 %v337, %v339
    %v341 = vrot.slane %v245, %v340
    %v342 = vcombine.high %v341, %v341
    %v344 = vunpack.c.l.s4 1966171168
    %v345 = vunpack.c.0.s8 %v344
    %v346 = vlaneseq
    %v347 = vshrl.u32 %v346, 7
    %v348 = vsub.s32 %v345, %v347
    %v349 = vrot.slane %v341, %v348
    %v351 = vunpack.c.l.s4 1966171168
    %v352 = vunpack.c.0.s8 %v351
    %v353 = vlaneseq
    %v354 = vshrl.u32 %v353, 7
    %v355 = vsub.s32 %v352, %v354
    %v356 = vrot.slane %v342, %v355
    %v359 = vadd.f32 %v330, %v349
    %v360 = vadd.f32 %v331, %v356
    %v361 = vxor.u32 %v359, 2147483648
    %v362 = vxor.u32 %v360, 2147483648
    %v363 = vmul.f32 %v361, 1.442695
    %v364 = vpow.pop %v363
    %v365 = vmul.f32 %v362, 1.442695
    %v366 = vpow.pop %v365
    %v367 = vadd.f32 %v364, 1.0
    %v368 = vadd.f32 %v366, 1.0
    %v369 = vrcp.pop %v367
    %v370 = vmul.f32 1.0, %v369
    %v371 = vrcp.pop %v368
    %v372 = vmul.f32 1.0, %v371
    %v374 = vlaneseq
    %v375 = vshrl.u32 %v374, 7
    %v376 = vsub.s32 0, %v375
    %v377 = vrot.slane %v74, %v376
    %v379 = vadd.f32 %v284, %v377
    %v382 = vunpack.c.l.s4 1966171168
    %v383 = vunpack.c.0.s8 %v382
    %v384 = vlaneseq
    %v385 = vshrl.u32 %v384, 7
    %v386 = vsub.s32 %v383, %v385
    %v387 = vrot.slane %v379, %v386
    %v388 = vcombine.high %v387, %v387
    %v390 = vunpack.c.l.s4 1966171168
    %v391 = vunpack.c.0.s8 %v390
    %v392 = vlaneseq
    %v393 = vshrl.u32 %v392, 7
    %v394 = vsub.s32 %v391, %v393
    %v395 = vrot.slane %v387, %v394
    %v397 = vunpack.c.l.s4 1966171168
    %v398 = vunpack.c.0.s8 %v397
    %v399 = vlaneseq
    %v400 = vshrl.u32 %v399, 7
    %v401 = vsub.s32 %v398, %v400
    %v402 = vrot.slane %v388, %v401
    %v405 = vmul.f32 %v325, %v395
    %v406 = vmul.f32 %v327, %v402
    %v407 = vrot.slane %v76, 2
    %v408 = vrot.slane %v78, 2
    %v411 = vadd.f32 %v407, %v405
    %v412 = vadd.f32 %v408, %v406
    %v413 = vtanh.pop %v411
    %v414 = vtanh.pop %v412
    %v417 = vunpack.c.l.s4 1966171168
    %v418 = vunpack.c.0.s8 %v417
    %v419 = vlaneseq
    %v420 = vshrl.u32 %v419, 7
    %v421 = vsub.s32 %v418, %v420
    %v422 = vrot.slane %v75, %v421
    %v423 = vcombine.high %v422, %v422
    %v425 = vunpack.c.l.s4 1966171168
    %v426 = vunpack.c.0.s8 %v425
    %v427 = vlaneseq
    %v428 = vshrl.u32 %v427, 7
    %v429 = vsub.s32 %v426, %v428
    %v430 = vrot.slane %v422, %v429
    %v432 = vunpack.c.l.s4 1966171168
    %v433 = vunpack.c.0.s8 %v432
    %v434 = vlaneseq
    %v435 = vshrl.u32 %v434, 7
    %v436 = vsub.s32 %v433, %v435
    %v437 = vrot.slane %v423, %v436
    %v440 = vmul.f32 %v370, %v430
    %v441 = vmul.f32 %v372, %v437
    %v442 = vsub.f32 1.0, %v370
    %v443 = vsub.f32 1.0, %v372
    %v444 = vmul.f32 %v442, %v413
    %v445 = vmul.f32 %v443, %v414
    %v446 = vadd.f32 %v440, %v444
    %v447 = vadd.f32 %v441, %v445
    %448 = vst [vmem:[#allocation6] sm:$0x1] %v446
    %449 = vst [vmem:[#allocation6 + $0x8] sm:$0x1] %v447
    %s450 = scalar_lea.vmem %s0, 1
    %v451 = vld [vmem:[%s450] ss:$8 sm:$0x7]
    %s452 = scalar_lea.vmem %s0, 25
    %v453 = vld [vmem:[%s452] ss:$8 sm:$0x7]
    %v454 = vpack.c.bf16 %v446, %v446
    %v455 = vpack.c.bf16 %v447, %v447
    %v458 = vunpack.c.l.b16 %v454
    %v459 = vunpack.c.l.b16 %v455
    %v460 = vrot.slane %v459, 7
    %vm461 = vcmask 1041409
    %v462 = vsel %vm461, %v460, %v458
    %v463 = vpack.c.b16 %v462, %v462
    %465 = vmatprep.subr.bf16.mxu0 %v161
    %466 = vmatpush1.bf16.msra.mxu0 %v160
    %467 = vmatprep.subr.bf16.mxu0 %v164
    %468 = vmatpush1.bf16.msra.mxu0 %v163
    %469 = vmatprep.subr.bf16.mxu0 %v167
    %470 = vmatpush1.bf16.msra.mxu0 %v166
    %471 = vmatprep.subr.bf16.mxu0 %v170
    %472 = vmatpush1.bf16.msra.mxu0 %v169
    %473 = vmatprep.subr.bf16.mxu0 %v173
    %474 = vmatpush1.bf16.msra.mxu0 %v172
    %475 = vmatprep.subr.bf16.mxu0 %v176
    %476 = vmatpush1.bf16.msra.mxu0 %v175
    %477 = vmatprep.subr.bf16.mxu0 %v179
    %478 = vmatpush1.bf16.msra.mxu0 %v178
    %479 = vmatprep.subr.bf16.mxu0 %v182
    %480 = vmatpush1.bf16.msra.mxu0 %v181
    %481 = vmatprep.subr.bf16.mxu0 0
    %482 = vmatpush1.bf16.msra.mxu0 0
    %483 = vmatprep.subr.bf16.mxu0 0
    %484 = vmatpush1.bf16.msra.mxu0 0
    %485 = vmatprep.subr.bf16.mxu0 0
    %486 = vmatpush1.bf16.msra.mxu0 0
    %487 = vmatprep.subr.bf16.mxu0 0
    %488 = vmatpush1.bf16.msra.mxu0 0
    %489 = vmatprep.subr.bf16.mxu0 0
    %490 = vmatpush1.bf16.msra.mxu0 0
    %491 = vmatprep.subr.bf16.mxu0 0
    %492 = vmatpush1.bf16.msra.mxu0 0
    %493 = vmatprep.subr.bf16.mxu0 0
    %494 = vmatpush1.bf16.msra.mxu0 0
    %495 = vmatprep.subr.bf16.mxu0 0
    %496 = vmatpush1.bf16.msra.mxu0 0
    %497 = vmatprep.mubr.bf16.mxu0 0
    %498 = vmatmul.mubr.bf16.gmra.mrb[0].mxu0 %v463
    %v499 = vpop.f32.mrb[0].mxu0
    %v500 = vadd.f32 0.0, %v499
    %v501 = vpop.f32.mrb[0].mxu0
    %v502 = vadd.f32 0.0, %v501
    %v503 = vpop.f32.mrb[0].mxu0
    %v504 = vpop.f32.mrb[0].mxu0
    %505 = vdwg.mxu0
    %506 = vmatprep.subr.bf16.mxu0 0
    %507 = vmatpush1.bf16.msra.mxu0 %v162
    %508 = vmatprep.subr.bf16.mxu0 0
    %509 = vmatpush1.bf16.msra.mxu0 %v165
    %510 = vmatprep.subr.bf16.mxu0 0
    %511 = vmatpush1.bf16.msra.mxu0 %v168
    %512 = vmatprep.subr.bf16.mxu0 0
    %513 = vmatpush1.bf16.msra.mxu0 %v171
    %514 = vmatprep.subr.bf16.mxu0 0
    %515 = vmatpush1.bf16.msra.mxu0 %v174
    %516 = vmatprep.subr.bf16.mxu0 0
    %517 = vmatpush1.bf16.msra.mxu0 %v177
    %518 = vmatprep.subr.bf16.mxu0 0
    %519 = vmatpush1.bf16.msra.mxu0 %v180
    %520 = vmatprep.subr.bf16.mxu0 0
    %521 = vmatpush1.bf16.msra.mxu0 %v183
    %522 = vmatprep.subr.bf16.mxu0 0
    %523 = vmatpush1.bf16.msra.mxu0 0
    %524 = vmatprep.subr.bf16.mxu0 0
    %525 = vmatpush1.bf16.msra.mxu0 0
    %526 = vmatprep.subr.bf16.mxu0 0
    %527 = vmatpush1.bf16.msra.mxu0 0
    %528 = vmatprep.subr.bf16.mxu0 0
    %529 = vmatpush1.bf16.msra.mxu0 0
    %530 = vmatprep.subr.bf16.mxu0 0
    %531 = vmatpush1.bf16.msra.mxu0 0
    %532 = vmatprep.subr.bf16.mxu0 0
    %533 = vmatpush1.bf16.msra.mxu0 0
    %534 = vmatprep.subr.bf16.mxu0 0
    %535 = vmatpush1.bf16.msra.mxu0 0
    %536 = vmatprep.subr.bf16.mxu0 0
    %537 = vmatpush1.bf16.msra.mxu0 0
    %538 = vmatprep.mubr.bf16.mxu0 0
    %539 = vmatmul.mubr.bf16.gmra.mrb[0].mxu0 %v463
    %v540 = vpop.f32.mrb[0].mxu0
    %v541 = vadd.f32 0.0, %v540
    %v542 = vpop.f32.mrb[0].mxu0
    %v543 = vpop.f32.mrb[0].mxu0
    %v544 = vpop.f32.mrb[0].mxu0
    %545 = vdwg.mxu0
    %v548 = vunpack.c.l.s4 1966171168
    %v549 = vunpack.c.0.s8 %v548
    %v550 = vlaneseq
    %v551 = vshrl.u32 %v550, 7
    %v552 = vsub.s32 %v549, %v551
    %v553 = vrot.slane %v500, %v552
    %v554 = vcombine.high %v553, %v553
    %v556 = vunpack.c.l.s4 1966171168
    %v557 = vunpack.c.0.s8 %v556
    %v558 = vlaneseq
    %v559 = vshrl.u32 %v558, 7
    %v560 = vsub.s32 %v557, %v559
    %v561 = vrot.slane %v553, %v560
    %v563 = vunpack.c.l.s4 1966171168
    %v564 = vunpack.c.0.s8 %v563
    %v565 = vlaneseq
    %v566 = vshrl.u32 %v565, 7
    %v567 = vsub.s32 %v564, %v566
    %v568 = vrot.slane %v554, %v567
    %v571 = vadd.f32 %v451, %v561
    %v572 = vadd.f32 %v453, %v568
    %v573 = vxor.u32 %v571, 2147483648
    %v574 = vxor.u32 %v572, 2147483648
    %v575 = vmul.f32 %v573, 1.442695
    %v576 = vpow.pop %v575
    %v577 = vmul.f32 %v574, 1.442695
    %v578 = vpow.pop %v577
    %v579 = vadd.f32 %v576, 1.0
    %v580 = vadd.f32 %v578, 1.0
    %v581 = vrcp.pop %v579
    %v582 = vmul.f32 1.0, %v581
    %v583 = vrcp.pop %v580
    %v584 = vmul.f32 1.0, %v583
    %v587 = vrot.slane %v451, 1
    %v588 = vrot.slane %v453, 1
    %v593 = vunpack.c.l.s4 1966171168
    %v594 = vunpack.c.0.s8 %v593
    %v595 = vlaneseq
    %v596 = vshrl.u32 %v595, 7
    %v597 = vsub.s32 %v594, %v596
    %v598 = vrot.slane %v502, %v597
    %v599 = vcombine.high %v598, %v598
    %v601 = vunpack.c.l.s4 1966171168
    %v602 = vunpack.c.0.s8 %v601
    %v603 = vlaneseq
    %v604 = vshrl.u32 %v603, 7
    %v605 = vsub.s32 %v602, %v604
    %v606 = vrot.slane %v598, %v605
    %v608 = vunpack.c.l.s4 1966171168
    %v609 = vunpack.c.0.s8 %v608
    %v610 = vlaneseq
    %v611 = vshrl.u32 %v610, 7
    %v612 = vsub.s32 %v609, %v611
    %v613 = vrot.slane %v599, %v612
    %v616 = vadd.f32 %v587, %v606
    %v617 = vadd.f32 %v588, %v613
    %v618 = vxor.u32 %v616, 2147483648
    %v619 = vxor.u32 %v617, 2147483648
    %v620 = vmul.f32 %v618, 1.442695
    %v621 = vpow.pop %v620
    %v622 = vmul.f32 %v619, 1.442695
    %v623 = vpow.pop %v622
    %v624 = vadd.f32 %v621, 1.0
    %v625 = vadd.f32 %v623, 1.0
    %v626 = vrcp.pop %v624
    %v627 = vmul.f32 1.0, %v626
    %v628 = vrcp.pop %v625
    %v629 = vmul.f32 1.0, %v628
    %v630 = vadd.f32 %v541, %v377
    %v633 = vunpack.c.l.s4 1966171168
    %v634 = vunpack.c.0.s8 %v633
    %v635 = vlaneseq
    %v636 = vshrl.u32 %v635, 7
    %v637 = vsub.s32 %v634, %v636
    %v638 = vrot.slane %v630, %v637
    %v639 = vcombine.high %v638, %v638
    %v641 = vunpack.c.l.s4 1966171168
    %v642 = vunpack.c.0.s8 %v641
    %v643 = vlaneseq
    %v644 = vshrl.u32 %v643, 7
    %v645 = vsub.s32 %v642, %v644
    %v646 = vrot.slane %v638, %v645
    %v648 = vunpack.c.l.s4 1966171168
    %v649 = vunpack.c.0.s8 %v648
    %v650 = vlaneseq
    %v651 = vshrl.u32 %v650, 7
    %v652 = vsub.s32 %v649, %v651
    %v653 = vrot.slane %v639, %v652
    %v656 = vmul.f32 %v582, %v646
    %v657 = vmul.f32 %v584, %v653
    %v658 = vrot.slane %v451, 2
    %v659 = vrot.slane %v453, 2
    %v662 = vadd.f32 %v658, %v656
    %v663 = vadd.f32 %v659, %v657
    %v664 = vtanh.pop %v662
    %v665 = vtanh.pop %v663
    %v666 = vmul.f32 %v627, %v446
    %v667 = vmul.f32 %v629, %v447
    %v668 = vsub.f32 1.0, %v627
    %v669 = vsub.f32 1.0, %v629
    %v670 = vmul.f32 %v668, %v664
    %v671 = vmul.f32 %v669, %v665
    %v672 = vadd.f32 %v666, %v670
    %v673 = vadd.f32 %v667, %v671
    %674 = vst [vmem:[#allocation6 + $0x1] sm:$0x1] %v672
    %675 = vst [vmem:[#allocation6 + $0x9] sm:$0x1] %v673
    %s676 = scalar_lea.vmem %s0, 2
    %v677 = vld [vmem:[%s676] ss:$8 sm:$0x7]
    %s678 = scalar_lea.vmem %s0, 26
    %v679 = vld [vmem:[%s678] ss:$8 sm:$0x7]
    %v680 = vpack.c.bf16 %v672, %v672
    %v681 = vpack.c.bf16 %v673, %v673
    %v684 = vunpack.c.l.b16 %v680
    %v685 = vunpack.c.l.b16 %v681
    %v686 = vrot.slane %v685, 7
    %v687 = vsel %vm461, %v686, %v684
    %v688 = vpack.c.b16 %v687, %v687
    %690 = vmatprep.subr.bf16.mxu0 %v161
    %691 = vmatpush1.bf16.msra.mxu0 %v160
    %692 = vmatprep.subr.bf16.mxu0 %v164
    %693 = vmatpush1.bf16.msra.mxu0 %v163
    %694 = vmatprep.subr.bf16.mxu0 %v167
    %695 = vmatpush1.bf16.msra.mxu0 %v166
    %696 = vmatprep.subr.bf16.mxu0 %v170
    %697 = vmatpush1.bf16.msra.mxu0 %v169
    %698 = vmatprep.subr.bf16.mxu0 %v173
    %699 = vmatpush1.bf16.msra.mxu0 %v172
    %700 = vmatprep.subr.bf16.mxu0 %v176
    %701 = vmatpush1.bf16.msra.mxu0 %v175
    %702 = vmatprep.subr.bf16.mxu0 %v179
    %703 = vmatpush1.bf16.msra.mxu0 %v178
    %704 = vmatprep.subr.bf16.mxu0 %v182
    %705 = vmatpush1.bf16.msra.mxu0 %v181
    %706 = vmatprep.subr.bf16.mxu0 0
    %707 = vmatpush1.bf16.msra.mxu0 0
    %708 = vmatprep.subr.bf16.mxu0 0
    %709 = vmatpush1.bf16.msra.mxu0 0
    %710 = vmatprep.subr.bf16.mxu0 0
    %711 = vmatpush1.bf16.msra.mxu0 0
    %712 = vmatprep.subr.bf16.mxu0 0
    %713 = vmatpush1.bf16.msra.mxu0 0
    %714 = vmatprep.subr.bf16.mxu0 0
    %715 = vmatpush1.bf16.msra.mxu0 0
    %716 = vmatprep.subr.bf16.mxu0 0
    %717 = vmatpush1.bf16.msra.mxu0 0
    %718 = vmatprep.subr.bf16.mxu0 0
    %719 = vmatpush1.bf16.msra.mxu0 0
    %720 = vmatprep.subr.bf16.mxu0 0
    %721 = vmatpush1.bf16.msra.mxu0 0
    %722 = vmatprep.mubr.bf16.mxu0 0
    %723 = vmatmul.mubr.bf16.gmra.mrb[0].mxu0 %v688
    %v724 = vpop.f32.mrb[0].mxu0
    %v725 = vadd.f32 0.0, %v724
    %v726 = vpop.f32.mrb[0].mxu0
    %v727 = vadd.f32 0.0, %v726
    %v728 = vpop.f32.mrb[0].mxu0
    %v729 = vpop.f32.mrb[0].mxu0
    %730 = vdwg.mxu0
    %731 = vmatprep.subr.bf16.mxu0 0
    %732 = vmatpush1.bf16.msra.mxu0 %v162
    %733 = vmatprep.subr.bf16.mxu0 0
    %734 = vmatpush1.bf16.msra.mxu0 %v165
    %735 = vmatprep.subr.bf16.mxu0 0
    %736 = vmatpush1.bf16.msra.mxu0 %v168
    %737 = vmatprep.subr.bf16.mxu0 0
    %738 = vmatpush1.bf16.msra.mxu0 %v171
    %739 = vmatprep.subr.bf16.mxu0 0
    %740 = vmatpush1.bf16.msra.mxu0 %v174
    %741 = vmatprep.subr.bf16.mxu0 0
    %742 = vmatpush1.bf16.msra.mxu0 %v177
    %743 = vmatprep.subr.bf16.mxu0 0
    %744 = vmatpush1.bf16.msra.mxu0 %v180
    %745 = vmatprep.subr.bf16.mxu0 0
    %746 = vmatpush1.bf16.msra.mxu0 %v183
    %747 = vmatprep.subr.bf16.mxu0 0
    %748 = vmatpush1.bf16.msra.mxu0 0
    %749 = vmatprep.subr.bf16.mxu0 0
    %750 = vmatpush1.bf16.msra.mxu0 0
    %751 = vmatprep.subr.bf16.mxu0 0
    %752 = vmatpush1.bf16.msra.mxu0 0
    %753 = vmatprep.subr.bf16.mxu0 0
    %754 = vmatpush1.bf16.msra.mxu0 0
    %755 = vmatprep.subr.bf16.mxu0 0
    %756 = vmatpush1.bf16.msra.mxu0 0
    %757 = vmatprep.subr.bf16.mxu0 0
    %758 = vmatpush1.bf16.msra.mxu0 0
    %759 = vmatprep.subr.bf16.mxu0 0
    %760 = vmatpush1.bf16.msra.mxu0 0
    %761 = vmatprep.subr.bf16.mxu0 0
    %762 = vmatpush1.bf16.msra.mxu0 0
    %763 = vmatprep.mubr.bf16.mxu0 0
    %764 = vmatmul.mubr.bf16.gmra.mrb[0].mxu0 %v688
    %v765 = vpop.f32.mrb[0].mxu0
    %v766 = vadd.f32 0.0, %v765
    %v767 = vpop.f32.mrb[0].mxu0
    %v768 = vpop.f32.mrb[0].mxu0
    %v769 = vpop.f32.mrb[0].mxu0
    %770 = vdwg.mxu0
    %v773 = vunpack.c.l.s4 1966171168
    %v774 = vunpack.c.0.s8 %v773
    %v775 = vlaneseq
    %v776 = vshrl.u32 %v775, 7
    %v777 = vsub.s32 %v774, %v776
    %v778 = vrot.slane %v725, %v777
    %v779 = vcombine.high %v778, %v778
    %v781 = vunpack.c.l.s4 1966171168
    %v782 = vunpack.c.0.s8 %v781
    %v783 = vlaneseq
    %v784 = vshrl.u32 %v783, 7
    %v785 = vsub.s32 %v782, %v784
    %v786 = vrot.slane %v778, %v785
    %v788 = vunpack.c.l.s4 1966171168
    %v789 = vunpack.c.0.s8 %v788
    %v790 = vlaneseq
    %v791 = vshrl.u32 %v790, 7
    %v792 = vsub.s32 %v789, %v791
    %v793 = vrot.slane %v779, %v792
    %v796 = vadd.f32 %v677, %v786
    %v797 = vadd.f32 %v679, %v793
    %v798 = vxor.u32 %v796, 2147483648
    %v799 = vxor.u32 %v797, 2147483648
    %v800 = vmul.f32 %v798, 1.442695
    %v801 = vpow.pop %v800
    %v802 = vmul.f32 %v799, 1.442695
    %v803 = vpow.pop %v802
    %v804 = vadd.f32 %v801, 1.0
    %v805 = vadd.f32 %v803, 1.0
    %v806 = vrcp.pop %v804
    %v807 = vmul.f32 1.0, %v806
    %v808 = vrcp.pop %v805
    %v809 = vmul.f32 1.0, %v808
    %v812 = vrot.slane %v677, 1
    %v813 = vrot.slane %v679, 1
    %v818 = vunpack.c.l.s4 1966171168
    %v819 = vunpack.c.0.s8 %v818
    %v820 = vlaneseq
    %v821 = vshrl.u32 %v820, 7
    %v822 = vsub.s32 %v819, %v821
    %v823 = vrot.slane %v727, %v822
    %v824 = vcombine.high %v823, %v823
    %v826 = vunpack.c.l.s4 1966171168
    %v827 = vunpack.c.0.s8 %v826
    %v828 = vlaneseq
    %v829 = vshrl.u32 %v828, 7
    %v830 = vsub.s32 %v827, %v829
    %v831 = vrot.slane %v823, %v830
    %v833 = vunpack.c.l.s4 1966171168
    %v834 = vunpack.c.0.s8 %v833
    %v835 = vlaneseq
    %v836 = vshrl.u32 %v835, 7
    %v837 = vsub.s32 %v834, %v836
    %v838 = vrot.slane %v824, %v837
    %v841 = vadd.f32 %v812, %v831
    %v842 = vadd.f32 %v813, %v838
    %v843 = vxor.u32 %v841, 2147483648
    %v844 = vxor.u32 %v842, 2147483648
    %v845 = vmul.f32 %v843, 1.442695
    %v846 = vpow.pop %v845
    %v847 = vmul.f32 %v844, 1.442695
    %v848 = vpow.pop %v847
    %v849 = vadd.f32 %v846, 1.0
    %v850 = vadd.f32 %v848, 1.0
    %v851 = vrcp.pop %v849
    %v852 = vmul.f32 1.0, %v851
    %v853 = vrcp.pop %v850
    %v854 = vmul.f32 1.0, %v853
    %v855 = vadd.f32 %v766, %v377
    %v858 = vunpack.c.l.s4 1966171168
    %v859 = vunpack.c.0.s8 %v858
    %v860 = vlaneseq
    %v861 = vshrl.u32 %v860, 7
    %v862 = vsub.s32 %v859, %v861
    %v863 = vrot.slane %v855, %v862
    %v864 = vcombine.high %v863, %v863
    %v866 = vunpack.c.l.s4 1966171168
    %v867 = vunpack.c.0.s8 %v866
    %v868 = vlaneseq
    %v869 = vshrl.u32 %v868, 7
    %v870 = vsub.s32 %v867, %v869
    %v871 = vrot.slane %v863, %v870
    %v873 = vunpack.c.l.s4 1966171168
    %v874 = vunpack.c.0.s8 %v873
    %v875 = vlaneseq
    %v876 = vshrl.u32 %v875, 7
    %v877 = vsub.s32 %v874, %v876
    %v878 = vrot.slane %v864, %v877
    %v881 = vmul.f32 %v807, %v871
    %v882 = vmul.f32 %v809, %v878
    %v883 = vrot.slane %v677, 2
    %v884 = vrot.slane %v679, 2
    %v887 = vadd.f32 %v883, %v881
    %v888 = vadd.f32 %v884, %v882
    %v889 = vtanh.pop %v887
    %v890 = vtanh.pop %v888
    %v891 = vmul.f32 %v852, %v672
    %v892 = vmul.f32 %v854, %v673
    %v893 = vsub.f32 1.0, %v852
    %v894 = vsub.f32 1.0, %v854
    %v895 = vmul.f32 %v893, %v889
    %v896 = vmul.f32 %v894, %v890
    %v897 = vadd.f32 %v891, %v895
    %v898 = vadd.f32 %v892, %v896
    %899 = vst [vmem:[#allocation6 + $0x2] sm:$0x1] %v897
    %900 = vst [vmem:[#allocation6 + $0xa] sm:$0x1] %v898
    %s901 = scalar_lea.vmem %s0, 3
    %v902 = vld [vmem:[%s901] ss:$8 sm:$0x7]
    %s903 = scalar_lea.vmem %s0, 27
    %v904 = vld [vmem:[%s903] ss:$8 sm:$0x7]
    %v905 = vpack.c.bf16 %v897, %v897
    %v906 = vpack.c.bf16 %v898, %v898
    %v909 = vunpack.c.l.b16 %v905
    %v910 = vunpack.c.l.b16 %v906
    %v911 = vrot.slane %v910, 7
    %v912 = vsel %vm461, %v911, %v909
    %v913 = vpack.c.b16 %v912, %v912
    %915 = vmatprep.subr.bf16.mxu0 %v161
    %916 = vmatpush1.bf16.msra.mxu0 %v160
    %917 = vmatprep.subr.bf16.mxu0 %v164
    %918 = vmatpush1.bf16.msra.mxu0 %v163
    %919 = vmatprep.subr.bf16.mxu0 %v167
    %920 = vmatpush1.bf16.msra.mxu0 %v166
    %921 = vmatprep.subr.bf16.mxu0 %v170
    %922 = vmatpush1.bf16.msra.mxu0 %v169
    %923 = vmatprep.subr.bf16.mxu0 %v173
    %924 = vmatpush1.bf16.msra.mxu0 %v172
    %925 = vmatprep.subr.bf16.mxu0 %v176
    %926 = vmatpush1.bf16.msra.mxu0 %v175
    %927 = vmatprep.subr.bf16.mxu0 %v179
    %928 = vmatpush1.bf16.msra.mxu0 %v178
    %929 = vmatprep.subr.bf16.mxu0 %v182
    %930 = vmatpush1.bf16.msra.mxu0 %v181
    %931 = vmatprep.subr.bf16.mxu0 0
    %932 = vmatpush1.bf16.msra.mxu0 0
    %933 = vmatprep.subr.bf16.mxu0 0
    %934 = vmatpush1.bf16.msra.mxu0 0
    %935 = vmatprep.subr.bf16.mxu0 0
    %936 = vmatpush1.bf16.msra.mxu0 0
    %937 = vmatprep.subr.bf16.mxu0 0
    %938 = vmatpush1.bf16.msra.mxu0 0
    %939 = vmatprep.subr.bf16.mxu0 0
    %940 = vmatpush1.bf16.msra.mxu0 0
    %941 = vmatprep.subr.bf16.mxu0 0
    %942 = vmatpush1.bf16.msra.mxu0 0
    %943 = vmatprep.subr.bf16.mxu0 0
    %944 = vmatpush1.bf16.msra.mxu0 0
    %945 = vmatprep.subr.bf16.mxu0 0
    %946 = vmatpush1.bf16.msra.mxu0 0
    %947 = vmatprep.mubr.bf16.mxu0 0
    %948 = vmatmul.mubr.bf16.gmra.mrb[0].mxu0 %v913
    %v949 = vpop.f32.mrb[0].mxu0
    %v950 = vadd.f32 0.0, %v949
    %v951 = vpop.f32.mrb[0].mxu0
    %v952 = vadd.f32 0.0, %v951
    %v953 = vpop.f32.mrb[0].mxu0
    %v954 = vpop.f32.mrb[0].mxu0
    %955 = vdwg.mxu0
    %956 = vmatprep.subr.bf16.mxu0 0
    %957 = vmatpush1.bf16.msra.mxu0 %v162
    %958 = vmatprep.subr.bf16.mxu0 0
    %959 = vmatpush1.bf16.msra.mxu0 %v165
    %960 = vmatprep.subr.bf16.mxu0 0
    %961 = vmatpush1.bf16.msra.mxu0 %v168
    %962 = vmatprep.subr.bf16.mxu0 0
    %963 = vmatpush1.bf16.msra.mxu0 %v171
    %964 = vmatprep.subr.bf16.mxu0 0
    %965 = vmatpush1.bf16.msra.mxu0 %v174
    %966 = vmatprep.subr.bf16.mxu0 0
    %967 = vmatpush1.bf16.msra.mxu0 %v177
    %968 = vmatprep.subr.bf16.mxu0 0
    %969 = vmatpush1.bf16.msra.mxu0 %v180
    %970 = vmatprep.subr.bf16.mxu0 0
    %971 = vmatpush1.bf16.msra.mxu0 %v183
    %972 = vmatprep.subr.bf16.mxu0 0
    %973 = vmatpush1.bf16.msra.mxu0 0
    %974 = vmatprep.subr.bf16.mxu0 0
    %975 = vmatpush1.bf16.msra.mxu0 0
    %976 = vmatprep.subr.bf16.mxu0 0
    %977 = vmatpush1.bf16.msra.mxu0 0
    %978 = vmatprep.subr.bf16.mxu0 0
    %979 = vmatpush1.bf16.msra.mxu0 0
    %980 = vmatprep.subr.bf16.mxu0 0
    %981 = vmatpush1.bf16.msra.mxu0 0
    %982 = vmatprep.subr.bf16.mxu0 0
    %983 = vmatpush1.bf16.msra.mxu0 0
    %984 = vmatprep.subr.bf16.mxu0 0
    %985 = vmatpush1.bf16.msra.mxu0 0
    %986 = vmatprep.subr.bf16.mxu0 0
    %987 = vmatpush1.bf16.msra.mxu0 0
    %988 = vmatprep.mubr.bf16.mxu0 0
    %989 = vmatmul.mubr.bf16.gmra.mrb[0].mxu0 %v913
    %v990 = vpop.f32.mrb[0].mxu0
    %v991 = vadd.f32 0.0, %v990
    %v992 = vpop.f32.mrb[0].mxu0
    %v993 = vpop.f32.mrb[0].mxu0
    %v994 = vpop.f32.mrb[0].mxu0
    %995 = vdwg.mxu0
    %v998 = vunpack.c.l.s4 1966171168
    %v999 = vunpack.c.0.s8 %v998
    %v1000 = vlaneseq
    %v1001 = vshrl.u32 %v1000, 7
    %v1002 = vsub.s32 %v999, %v1001
    %v1003 = vrot.slane %v950, %v1002
    %v1004 = vcombine.high %v1003, %v1003
    %v1006 = vunpack.c.l.s4 1966171168
    %v1007 = vunpack.c.0.s8 %v1006
    %v1008 = vlaneseq
    %v1009 = vshrl.u32 %v1008, 7
    %v1010 = vsub.s32 %v1007, %v1009
    %v1011 = vrot.slane %v1003, %v1010
    %v1013 = vunpack.c.l.s4 1966171168
    %v1014 = vunpack.c.0.s8 %v1013
    %v1015 = vlaneseq
    %v1016 = vshrl.u32 %v1015, 7
    %v1017 = vsub.s32 %v1014, %v1016
    %v1018 = vrot.slane %v1004, %v1017
    %v1021 = vadd.f32 %v902, %v1011
    %v1022 = vadd.f32 %v904, %v1018
    %v1023 = vxor.u32 %v1021, 2147483648
    %v1024 = vxor.u32 %v1022, 2147483648
    %v1025 = vmul.f32 %v1023, 1.442695
    %v1026 = vpow.pop %v1025
    %v1027 = vmul.f32 %v1024, 1.442695
    %v1028 = vpow.pop %v1027
    %v1029 = vadd.f32 %v1026, 1.0
    %v1030 = vadd.f32 %v1028, 1.0
    %v1031 = vrcp.pop %v1029
    %v1032 = vmul.f32 1.0, %v1031
    %v1033 = vrcp.pop %v1030
    %v1034 = vmul.f32 1.0, %v1033
    %v1037 = vrot.slane %v902, 1
    %v1038 = vrot.slane %v904, 1
    %v1043 = vunpack.c.l.s4 1966171168
    %v1044 = vunpack.c.0.s8 %v1043
    %v1045 = vlaneseq
    %v1046 = vshrl.u32 %v1045, 7
    %v1047 = vsub.s32 %v1044, %v1046
    %v1048 = vrot.slane %v952, %v1047
    %v1049 = vcombine.high %v1048, %v1048
    %v1051 = vunpack.c.l.s4 1966171168
    %v1052 = vunpack.c.0.s8 %v1051
    %v1053 = vlaneseq
    %v1054 = vshrl.u32 %v1053, 7
    %v1055 = vsub.s32 %v1052, %v1054
    %v1056 = vrot.slane %v1048, %v1055
    %v1058 = vunpack.c.l.s4 1966171168
    %v1059 = vunpack.c.0.s8 %v1058
    %v1060 = vlaneseq
    %v1061 = vshrl.u32 %v1060, 7
    %v1062 = vsub.s32 %v1059, %v1061
    %v1063 = vrot.slane %v1049, %v1062
    %v1066 = vadd.f32 %v1037, %v1056
    %v1067 = vadd.f32 %v1038, %v1063
    %v1068 = vxor.u32 %v1066, 2147483648
    %v1069 = vxor.u32 %v1067, 2147483648
    %v1070 = vmul.f32 %v1068, 1.442695
    %v1071 = vpow.pop %v1070
    %v1072 = vmul.f32 %v1069, 1.442695
    %v1073 = vpow.pop %v1072
    %v1074 = vadd.f32 %v1071, 1.0
    %v1075 = vadd.f32 %v1073, 1.0
    %v1076 = vrcp.pop %v1074
    %v1077 = vmul.f32 1.0, %v1076
    %v1078 = vrcp.pop %v1075
    %v1079 = vmul.f32 1.0, %v1078
    %v1080 = vadd.f32 %v991, %v377
    %v1083 = vunpack.c.l.s4 1966171168
    %v1084 = vunpack.c.0.s8 %v1083
    %v1085 = vlaneseq
    %v1086 = vshrl.u32 %v1085, 7
    %v1087 = vsub.s32 %v1084, %v1086
    %v1088 = vrot.slane %v1080, %v1087
    %v1089 = vcombine.high %v1088, %v1088
    %v1091 = vunpack.c.l.s4 1966171168
    %v1092 = vunpack.c.0.s8 %v1091
    %v1093 = vlaneseq
    %v1094 = vshrl.u32 %v1093, 7
    %v1095 = vsub.s32 %v1092, %v1094
    %v1096 = vrot.slane %v1088, %v1095
    %v1098 = vunpack.c.l.s4 1966171168
    %v1099 = vunpack.c.0.s8 %v1098
    %v1100 = vlaneseq
    %v1101 = vshrl.u32 %v1100, 7
    %v1102 = vsub.s32 %v1099, %v1101
    %v1103 = vrot.slane %v1089, %v1102
    %v1106 = vmul.f32 %v1032, %v1096
    %v1107 = vmul.f32 %v1034, %v1103
    %v1108 = vrot.slane %v902, 2
    %v1109 = vrot.slane %v904, 2
    %v1112 = vadd.f32 %v1108, %v1106
    %v1113 = vadd.f32 %v1109, %v1107
    %v1114 = vtanh.pop %v1112
    %v1115 = vtanh.pop %v1113
    %v1116 = vmul.f32 %v1077, %v897
    %v1117 = vmul.f32 %v1079, %v898
    %v1118 = vsub.f32 1.0, %v1077
    %v1119 = vsub.f32 1.0, %v1079
    %v1120 = vmul.f32 %v1118, %v1114
    %v1121 = vmul.f32 %v1119, %v1115
    %v1122 = vadd.f32 %v1116, %v1120
    %v1123 = vadd.f32 %v1117, %v1121
    %1124 = vst [vmem:[#allocation6 + $0x3] sm:$0x1] %v1122
    %1125 = vst [vmem:[#allocation6 + $0xb] sm:$0x1] %v1123
    %s1126 = scalar_lea.vmem %s0, 4
    %v1127 = vld [vmem:[%s1126] ss:$8 sm:$0x7]
    %s1128 = scalar_lea.vmem %s0, 28
    %v1129 = vld [vmem:[%s1128] ss:$8 sm:$0x7]
    %v1130 = vpack.c.bf16 %v1122, %v1122
    %v1131 = vpack.c.bf16 %v1123, %v1123
    %v1134 = vunpack.c.l.b16 %v1130
    %v1135 = vunpack.c.l.b16 %v1131
    %v1136 = vrot.slane %v1135, 7
    %v1137 = vsel %vm461, %v1136, %v1134
    %v1138 = vpack.c.b16 %v1137, %v1137
    %1140 = vmatprep.subr.bf16.mxu0 %v161
    %1141 = vmatpush1.bf16.msra.mxu0 %v160
    %1142 = vmatprep.subr.bf16.mxu0 %v164
    %1143 = vmatpush1.bf16.msra.mxu0 %v163
    %1144 = vmatprep.subr.bf16.mxu0 %v167
    %1145 = vmatpush1.bf16.msra.mxu0 %v166
    %1146 = vmatprep.subr.bf16.mxu0 %v170
    %1147 = vmatpush1.bf16.msra.mxu0 %v169
    %1148 = vmatprep.subr.bf16.mxu0 %v173
    %1149 = vmatpush1.bf16.msra.mxu0 %v172
    %1150 = vmatprep.subr.bf16.mxu0 %v176
    %1151 = vmatpush1.bf16.msra.mxu0 %v175
    %1152 = vmatprep.subr.bf16.mxu0 %v179
    %1153 = vmatpush1.bf16.msra.mxu0 %v178
    %1154 = vmatprep.subr.bf16.mxu0 %v182
    %1155 = vmatpush1.bf16.msra.mxu0 %v181
    %1156 = vmatprep.subr.bf16.mxu0 0
    %1157 = vmatpush1.bf16.msra.mxu0 0
    %1158 = vmatprep.subr.bf16.mxu0 0
    %1159 = vmatpush1.bf16.msra.mxu0 0
    %1160 = vmatprep.subr.bf16.mxu0 0
    %1161 = vmatpush1.bf16.msra.mxu0 0
    %1162 = vmatprep.subr.bf16.mxu0 0
    %1163 = vmatpush1.bf16.msra.mxu0 0
    %1164 = vmatprep.subr.bf16.mxu0 0
    %1165 = vmatpush1.bf16.msra.mxu0 0
    %1166 = vmatprep.subr.bf16.mxu0 0
    %1167 = vmatpush1.bf16.msra.mxu0 0
    %1168 = vmatprep.subr.bf16.mxu0 0
    %1169 = vmatpush1.bf16.msra.mxu0 0
    %1170 = vmatprep.subr.bf16.mxu0 0
    %1171 = vmatpush1.bf16.msra.mxu0 0
    %1172 = vmatprep.mubr.bf16.mxu0 0
    %1173 = vmatmul.mubr.bf16.gmra.mrb[0].mxu0 %v1138
    %v1174 = vpop.f32.mrb[0].mxu0
    %v1175 = vadd.f32 0.0, %v1174
    %v1176 = vpop.f32.mrb[0].mxu0
    %v1177 = vadd.f32 0.0, %v1176
    %v1178 = vpop.f32.mrb[0].mxu0
    %v1179 = vpop.f32.mrb[0].mxu0
    %1180 = vdwg.mxu0
    %1181 = vmatprep.subr.bf16.mxu0 0
    %1182 = vmatpush1.bf16.msra.mxu0 %v162
    %1183 = vmatprep.subr.bf16.mxu0 0
    %1184 = vmatpush1.bf16.msra.mxu0 %v165
    %1185 = vmatprep.subr.bf16.mxu0 0
    %1186 = vmatpush1.bf16.msra.mxu0 %v168
    %1187 = vmatprep.subr.bf16.mxu0 0
    %1188 = vmatpush1.bf16.msra.mxu0 %v171
    %1189 = vmatprep.subr.bf16.mxu0 0
    %1190 = vmatpush1.bf16.msra.mxu0 %v174
    %1191 = vmatprep.subr.bf16.mxu0 0
    %1192 = vmatpush1.bf16.msra.mxu0 %v177
    %1193 = vmatprep.subr.bf16.mxu0 0
    %1194 = vmatpush1.bf16.msra.mxu0 %v180
    %1195 = vmatprep.subr.bf16.mxu0 0
    %1196 = vmatpush1.bf16.msra.mxu0 %v183
    %1197 = vmatprep.subr.bf16.mxu0 0
    %1198 = vmatpush1.bf16.msra.mxu0 0
    %1199 = vmatprep.subr.bf16.mxu0 0
    %1200 = vmatpush1.bf16.msra.mxu0 0
    %1201 = vmatprep.subr.bf16.mxu0 0
    %1202 = vmatpush1.bf16.msra.mxu0 0
    %1203 = vmatprep.subr.bf16.mxu0 0
    %1204 = vmatpush1.bf16.msra.mxu0 0
    %1205 = vmatprep.subr.bf16.mxu0 0
    %1206 = vmatpush1.bf16.msra.mxu0 0
    %1207 = vmatprep.subr.bf16.mxu0 0
    %1208 = vmatpush1.bf16.msra.mxu0 0
    %1209 = vmatprep.subr.bf16.mxu0 0
    %1210 = vmatpush1.bf16.msra.mxu0 0
    %1211 = vmatprep.subr.bf16.mxu0 0
    %1212 = vmatpush1.bf16.msra.mxu0 0
    %1213 = vmatprep.mubr.bf16.mxu0 0
    %1214 = vmatmul.mubr.bf16.gmra.mrb[0].mxu0 %v1138
    %v1215 = vpop.f32.mrb[0].mxu0
    %v1216 = vadd.f32 0.0, %v1215
    %v1217 = vpop.f32.mrb[0].mxu0
    %v1218 = vpop.f32.mrb[0].mxu0
    %v1219 = vpop.f32.mrb[0].mxu0
    %1220 = vdwg.mxu0
    %v1223 = vunpack.c.l.s4 1966171168
    %v1224 = vunpack.c.0.s8 %v1223
    %v1225 = vlaneseq
    %v1226 = vshrl.u32 %v1225, 7
    %v1227 = vsub.s32 %v1224, %v1226
    %v1228 = vrot.slane %v1175, %v1227
    %v1229 = vcombine.high %v1228, %v1228
    %v1231 = vunpack.c.l.s4 1966171168
    %v1232 = vunpack.c.0.s8 %v1231
    %v1233 = vlaneseq
    %v1234 = vshrl.u32 %v1233, 7
    %v1235 = vsub.s32 %v1232, %v1234
    %v1236 = vrot.slane %v1228, %v1235
    %v1238 = vunpack.c.l.s4 1966171168
    %v1239 = vunpack.c.0.s8 %v1238
    %v1240 = vlaneseq
    %v1241 = vshrl.u32 %v1240, 7
    %v1242 = vsub.s32 %v1239, %v1241
    %v1243 = vrot.slane %v1229, %v1242
    %v1246 = vadd.f32 %v1127, %v1236
    %v1247 = vadd.f32 %v1129, %v1243
    %v1248 = vxor.u32 %v1246, 2147483648
    %v1249 = vxor.u32 %v1247, 2147483648
    %v1250 = vmul.f32 %v1248, 1.442695
    %v1251 = vpow.pop %v1250
    %v1252 = vmul.f32 %v1249, 1.442695
    %v1253 = vpow.pop %v1252
    %v1254 = vadd.f32 %v1251, 1.0
    %v1255 = vadd.f32 %v1253, 1.0
    %v1256 = vrcp.pop %v1254
    %v1257 = vmul.f32 1.0, %v1256
    %v1258 = vrcp.pop %v1255
    %v1259 = vmul.f32 1.0, %v1258
    %v1262 = vrot.slane %v1127, 1
    %v1263 = vrot.slane %v1129, 1
    %v1268 = vunpack.c.l.s4 1966171168
    %v1269 = vunpack.c.0.s8 %v1268
    %v1270 = vlaneseq
    %v1271 = vshrl.u32 %v1270, 7
    %v1272 = vsub.s32 %v1269, %v1271
    %v1273 = vrot.slane %v1177, %v1272
    %v1274 = vcombine.high %v1273, %v1273
    %v1276 = vunpack.c.l.s4 1966171168
    %v1277 = vunpack.c.0.s8 %v1276
    %v1278 = vlaneseq
    %v1279 = vshrl.u32 %v1278, 7
    %v1280 = vsub.s32 %v1277, %v1279
    %v1281 = vrot.slane %v1273, %v1280
    %v1283 = vunpack.c.l.s4 1966171168
    %v1284 = vunpack.c.0.s8 %v1283
    %v1285 = vlaneseq
    %v1286 = vshrl.u32 %v1285, 7
    %v1287 = vsub.s32 %v1284, %v1286
    %v1288 = vrot.slane %v1274, %v1287
    %v1291 = vadd.f32 %v1262, %v1281
    %v1292 = vadd.f32 %v1263, %v1288
    %v1293 = vxor.u32 %v1291, 2147483648
    %v1294 = vxor.u32 %v1292, 2147483648
    %v1295 = vmul.f32 %v1293, 1.442695
    %v1296 = vpow.pop %v1295
    %v1297 = vmul.f32 %v1294, 1.442695
    %v1298 = vpow.pop %v1297
    %v1299 = vadd.f32 %v1296, 1.0
    %v1300 = vadd.f32 %v1298, 1.0
    %v1301 = vrcp.pop %v1299
    %v1302 = vmul.f32 1.0, %v1301
    %v1303 = vrcp.pop %v1300
    %v1304 = vmul.f32 1.0, %v1303
    %v1305 = vadd.f32 %v1216, %v377
    %v1308 = vunpack.c.l.s4 1966171168
    %v1309 = vunpack.c.0.s8 %v1308
    %v1310 = vlaneseq
    %v1311 = vshrl.u32 %v1310, 7
    %v1312 = vsub.s32 %v1309, %v1311
    %v1313 = vrot.slane %v1305, %v1312
    %v1314 = vcombine.high %v1313, %v1313
    %v1316 = vunpack.c.l.s4 1966171168
    %v1317 = vunpack.c.0.s8 %v1316
    %v1318 = vlaneseq
    %v1319 = vshrl.u32 %v1318, 7
    %v1320 = vsub.s32 %v1317, %v1319
    %v1321 = vrot.slane %v1313, %v1320
    %v1323 = vunpack.c.l.s4 1966171168
    %v1324 = vunpack.c.0.s8 %v1323
    %v1325 = vlaneseq
    %v1326 = vshrl.u32 %v1325, 7
    %v1327 = vsub.s32 %v1324, %v1326
    %v1328 = vrot.slane %v1314, %v1327
    %v1331 = vmul.f32 %v1257, %v1321
    %v1332 = vmul.f32 %v1259, %v1328
    %v1333 = vrot.slane %v1127, 2
    %v1334 = vrot.slane %v1129, 2
    %v1337 = vadd.f32 %v1333, %v1331
    %v1338 = vadd.f32 %v1334, %v1332
    %v1339 = vtanh.pop %v1337
    %v1340 = vtanh.pop %v1338
    %v1341 = vmul.f32 %v1302, %v1122
    %v1342 = vmul.f32 %v1304, %v1123
    %v1343 = vsub.f32 1.0, %v1302
    %v1344 = vsub.f32 1.0, %v1304
    %v1345 = vmul.f32 %v1343, %v1339
    %v1346 = vmul.f32 %v1344, %v1340
    %v1347 = vadd.f32 %v1341, %v1345
    %v1348 = vadd.f32 %v1342, %v1346
    %1349 = vst [vmem:[#allocation6 + $0x4] sm:$0x1] %v1347
    %1350 = vst [vmem:[#allocation6 + $0xc] sm:$0x1] %v1348
    %s1351 = scalar_lea.vmem %s0, 5
    %v1352 = vld [vmem:[%s1351] ss:$8 sm:$0x7]
    %s1353 = scalar_lea.vmem %s0, 29
    %v1354 = vld [vmem:[%s1353] ss:$8 sm:$0x7]
    %v1355 = vpack.c.bf16 %v1347, %v1347
    %v1356 = vpack.c.bf16 %v1348, %v1348
    %v1359 = vunpack.c.l.b16 %v1355
    %v1360 = vunpack.c.l.b16 %v1356
    %v1361 = vrot.slane %v1360, 7
    %v1362 = vsel %vm461, %v1361, %v1359
    %v1363 = vpack.c.b16 %v1362, %v1362
    %1365 = vmatprep.subr.bf16.mxu0 %v161
    %1366 = vmatpush1.bf16.msra.mxu0 %v160
    %1367 = vmatprep.subr.bf16.mxu0 %v164
    %1368 = vmatpush1.bf16.msra.mxu0 %v163
    %1369 = vmatprep.subr.bf16.mxu0 %v167
    %1370 = vmatpush1.bf16.msra.mxu0 %v166
    %1371 = vmatprep.subr.bf16.mxu0 %v170
    %1372 = vmatpush1.bf16.msra.mxu0 %v169
    %1373 = vmatprep.subr.bf16.mxu0 %v173
    %1374 = vmatpush1.bf16.msra.mxu0 %v172
    %1375 = vmatprep.subr.bf16.mxu0 %v176
    %1376 = vmatpush1.bf16.msra.mxu0 %v175
    %1377 = vmatprep.subr.bf16.mxu0 %v179
    %1378 = vmatpush1.bf16.msra.mxu0 %v178
    %1379 = vmatprep.subr.bf16.mxu0 %v182
    %1380 = vmatpush1.bf16.msra.mxu0 %v181
    %1381 = vmatprep.subr.bf16.mxu0 0
    %1382 = vmatpush1.bf16.msra.mxu0 0
    %1383 = vmatprep.subr.bf16.mxu0 0
    %1384 = vmatpush1.bf16.msra.mxu0 0
    %1385 = vmatprep.subr.bf16.mxu0 0
    %1386 = vmatpush1.bf16.msra.mxu0 0
    %1387 = vmatprep.subr.bf16.mxu0 0
    %1388 = vmatpush1.bf16.msra.mxu0 0
    %1389 = vmatprep.subr.bf16.mxu0 0
    %1390 = vmatpush1.bf16.msra.mxu0 0
    %1391 = vmatprep.subr.bf16.mxu0 0
    %1392 = vmatpush1.bf16.msra.mxu0 0
    %1393 = vmatprep.subr.bf16.mxu0 0
    %1394 = vmatpush1.bf16.msra.mxu0 0
    %1395 = vmatprep.subr.bf16.mxu0 0
    %1396 = vmatpush1.bf16.msra.mxu0 0
    %1397 = vmatprep.mubr.bf16.mxu0 0
    %1398 = vmatmul.mubr.bf16.gmra.mrb[0].mxu0 %v1363
    %v1399 = vpop.f32.mrb[0].mxu0
    %v1400 = vadd.f32 0.0, %v1399
    %v1401 = vpop.f32.mrb[0].mxu0
    %v1402 = vadd.f32 0.0, %v1401
    %v1403 = vpop.f32.mrb[0].mxu0
    %v1404 = vpop.f32.mrb[0].mxu0
    %1405 = vdwg.mxu0
    %1406 = vmatprep.subr.bf16.mxu0 0
    %1407 = vmatpush1.bf16.msra.mxu0 %v162
    %1408 = vmatprep.subr.bf16.mxu0 0
    %1409 = vmatpush1.bf16.msra.mxu0 %v165
    %1410 = vmatprep.subr.bf16.mxu0 0
    %1411 = vmatpush1.bf16.msra.mxu0 %v168
    %1412 = vmatprep.subr.bf16.mxu0 0
    %1413 = vmatpush1.bf16.msra.mxu0 %v171
    %1414 = vmatprep.subr.bf16.mxu0 0
    %1415 = vmatpush1.bf16.msra.mxu0 %v174
    %1416 = vmatprep.subr.bf16.mxu0 0
    %1417 = vmatpush1.bf16.msra.mxu0 %v177
    %1418 = vmatprep.subr.bf16.mxu0 0
    %1419 = vmatpush1.bf16.msra.mxu0 %v180
    %1420 = vmatprep.subr.bf16.mxu0 0
    %1421 = vmatpush1.bf16.msra.mxu0 %v183
    %1422 = vmatprep.subr.bf16.mxu0 0
    %1423 = vmatpush1.bf16.msra.mxu0 0
    %1424 = vmatprep.subr.bf16.mxu0 0
    %1425 = vmatpush1.bf16.msra.mxu0 0
    %1426 = vmatprep.subr.bf16.mxu0 0
    %1427 = vmatpush1.bf16.msra.mxu0 0
    %1428 = vmatprep.subr.bf16.mxu0 0
    %1429 = vmatpush1.bf16.msra.mxu0 0
    %1430 = vmatprep.subr.bf16.mxu0 0
    %1431 = vmatpush1.bf16.msra.mxu0 0
    %1432 = vmatprep.subr.bf16.mxu0 0
    %1433 = vmatpush1.bf16.msra.mxu0 0
    %1434 = vmatprep.subr.bf16.mxu0 0
    %1435 = vmatpush1.bf16.msra.mxu0 0
    %1436 = vmatprep.subr.bf16.mxu0 0
    %1437 = vmatpush1.bf16.msra.mxu0 0
    %1438 = vmatprep.mubr.bf16.mxu0 0
    %1439 = vmatmul.mubr.bf16.gmra.mrb[0].mxu0 %v1363
    %v1440 = vpop.f32.mrb[0].mxu0
    %v1441 = vadd.f32 0.0, %v1440
    %v1442 = vpop.f32.mrb[0].mxu0
    %v1443 = vpop.f32.mrb[0].mxu0
    %v1444 = vpop.f32.mrb[0].mxu0
    %1445 = vdwg.mxu0
    %v1448 = vunpack.c.l.s4 1966171168
    %v1449 = vunpack.c.0.s8 %v1448
    %v1450 = vlaneseq
    %v1451 = vshrl.u32 %v1450, 7
    %v1452 = vsub.s32 %v1449, %v1451
    %v1453 = vrot.slane %v1400, %v1452
    %v1454 = vcombine.high %v1453, %v1453
    %v1456 = vunpack.c.l.s4 1966171168
    %v1457 = vunpack.c.0.s8 %v1456
    %v1458 = vlaneseq
    %v1459 = vshrl.u32 %v1458, 7
    %v1460 = vsub.s32 %v1457, %v1459
    %v1461 = vrot.slane %v1453, %v1460
    %v1463 = vunpack.c.l.s4 1966171168
    %v1464 = vunpack.c.0.s8 %v1463
    %v1465 = vlaneseq
    %v1466 = vshrl.u32 %v1465, 7
    %v1467 = vsub.s32 %v1464, %v1466
    %v1468 = vrot.slane %v1454, %v1467
    %v1471 = vadd.f32 %v1352, %v1461
    %v1472 = vadd.f32 %v1354, %v1468
    %v1473 = vxor.u32 %v1471, 2147483648
    %v1474 = vxor.u32 %v1472, 2147483648
    %v1475 = vmul.f32 %v1473, 1.442695
    %v1476 = vpow.pop %v1475
    %v1477 = vmul.f32 %v1474, 1.442695
    %v1478 = vpow.pop %v1477
    %v1479 = vadd.f32 %v1476, 1.0
    %v1480 = vadd.f32 %v1478, 1.0
    %v1481 = vrcp.pop %v1479
    %v1482 = vmul.f32 1.0, %v1481
    %v1483 = vrcp.pop %v1480
    %v1484 = vmul.f32 1.0, %v1483
    %v1487 = vrot.slane %v1352, 1
    %v1488 = vrot.slane %v1354, 1
    %v1493 = vunpack.c.l.s4 1966171168
    %v1494 = vunpack.c.0.s8 %v1493
    %v1495 = vlaneseq
    %v1496 = vshrl.u32 %v1495, 7
    %v1497 = vsub.s32 %v1494, %v1496
    %v1498 = vrot.slane %v1402, %v1497
    %v1499 = vcombine.high %v1498, %v1498
    %v1501 = vunpack.c.l.s4 1966171168
    %v1502 = vunpack.c.0.s8 %v1501
    %v1503 = vlaneseq
    %v1504 = vshrl.u32 %v1503, 7
    %v1505 = vsub.s32 %v1502, %v1504
    %v1506 = vrot.slane %v1498, %v1505
    %v1508 = vunpack.c.l.s4 1966171168
    %v1509 = vunpack.c.0.s8 %v1508
    %v1510 = vlaneseq
    %v1511 = vshrl.u32 %v1510, 7
    %v1512 = vsub.s32 %v1509, %v1511
    %v1513 = vrot.slane %v1499, %v1512
    %v1516 = vadd.f32 %v1487, %v1506
    %v1517 = vadd.f32 %v1488, %v1513
    %v1518 = vxor.u32 %v1516, 2147483648
    %v1519 = vxor.u32 %v1517, 2147483648
    %v1520 = vmul.f32 %v1518, 1.442695
    %v1521 = vpow.pop %v1520
    %v1522 = vmul.f32 %v1519, 1.442695
    %v1523 = vpow.pop %v1522
    %v1524 = vadd.f32 %v1521, 1.0
    %v1525 = vadd.f32 %v1523, 1.0
    %v1526 = vrcp.pop %v1524
    %v1527 = vmul.f32 1.0, %v1526
    %v1528 = vrcp.pop %v1525
    %v1529 = vmul.f32 1.0, %v1528
    %v1530 = vadd.f32 %v1441, %v377
    %v1533 = vunpack.c.l.s4 1966171168
    %v1534 = vunpack.c.0.s8 %v1533
    %v1535 = vlaneseq
    %v1536 = vshrl.u32 %v1535, 7
    %v1537 = vsub.s32 %v1534, %v1536
    %v1538 = vrot.slane %v1530, %v1537
    %v1539 = vcombine.high %v1538, %v1538
    %v1541 = vunpack.c.l.s4 1966171168
    %v1542 = vunpack.c.0.s8 %v1541
    %v1543 = vlaneseq
    %v1544 = vshrl.u32 %v1543, 7
    %v1545 = vsub.s32 %v1542, %v1544
    %v1546 = vrot.slane %v1538, %v1545
    %v1548 = vunpack.c.l.s4 1966171168
    %v1549 = vunpack.c.0.s8 %v1548
    %v1550 = vlaneseq
    %v1551 = vshrl.u32 %v1550, 7
    %v1552 = vsub.s32 %v1549, %v1551
    %v1553 = vrot.slane %v1539, %v1552
    %v1556 = vmul.f32 %v1482, %v1546
    %v1557 = vmul.f32 %v1484, %v1553
    %v1558 = vrot.slane %v1352, 2
    %v1559 = vrot.slane %v1354, 2
    %v1562 = vadd.f32 %v1558, %v1556
    %v1563 = vadd.f32 %v1559, %v1557
    %v1564 = vtanh.pop %v1562
    %v1565 = vtanh.pop %v1563
    %v1566 = vmul.f32 %v1527, %v1347
    %v1567 = vmul.f32 %v1529, %v1348
    %v1568 = vsub.f32 1.0, %v1527
    %v1569 = vsub.f32 1.0, %v1529
    %v1570 = vmul.f32 %v1568, %v1564
    %v1571 = vmul.f32 %v1569, %v1565
    %v1572 = vadd.f32 %v1566, %v1570
    %v1573 = vadd.f32 %v1567, %v1571
    %1574 = vst [vmem:[#allocation6 + $0x5] sm:$0x1] %v1572
    %1575 = vst [vmem:[#allocation6 + $0xd] sm:$0x1] %v1573
    %s1576 = scalar_lea.vmem %s0, 6
    %v1577 = vld [vmem:[%s1576] ss:$8 sm:$0x7]
    %s1578 = scalar_lea.vmem %s0, 30
    %v1579 = vld [vmem:[%s1578] ss:$8 sm:$0x7]
    %v1580 = vpack.c.bf16 %v1572, %v1572
    %v1581 = vpack.c.bf16 %v1573, %v1573
    %v1584 = vunpack.c.l.b16 %v1580
    %v1585 = vunpack.c.l.b16 %v1581
    %v1586 = vrot.slane %v1585, 7
    %v1587 = vsel %vm461, %v1586, %v1584
    %v1588 = vpack.c.b16 %v1587, %v1587
    %1590 = vmatprep.subr.bf16.mxu0 %v161
    %1591 = vmatpush1.bf16.msra.mxu0 %v160
    %1592 = vmatprep.subr.bf16.mxu0 %v164
    %1593 = vmatpush1.bf16.msra.mxu0 %v163
    %1594 = vmatprep.subr.bf16.mxu0 %v167
    %1595 = vmatpush1.bf16.msra.mxu0 %v166
    %1596 = vmatprep.subr.bf16.mxu0 %v170
    %1597 = vmatpush1.bf16.msra.mxu0 %v169
    %1598 = vmatprep.subr.bf16.mxu0 %v173
    %1599 = vmatpush1.bf16.msra.mxu0 %v172
    %1600 = vmatprep.subr.bf16.mxu0 %v176
    %1601 = vmatpush1.bf16.msra.mxu0 %v175
    %1602 = vmatprep.subr.bf16.mxu0 %v179
    %1603 = vmatpush1.bf16.msra.mxu0 %v178
    %1604 = vmatprep.subr.bf16.mxu0 %v182
    %1605 = vmatpush1.bf16.msra.mxu0 %v181
    %1606 = vmatprep.subr.bf16.mxu0 0
    %1607 = vmatpush1.bf16.msra.mxu0 0
    %1608 = vmatprep.subr.bf16.mxu0 0
    %1609 = vmatpush1.bf16.msra.mxu0 0
    %1610 = vmatprep.subr.bf16.mxu0 0
    %1611 = vmatpush1.bf16.msra.mxu0 0
    %1612 = vmatprep.subr.bf16.mxu0 0
    %1613 = vmatpush1.bf16.msra.mxu0 0
    %1614 = vmatprep.subr.bf16.mxu0 0
    %1615 = vmatpush1.bf16.msra.mxu0 0
    %1616 = vmatprep.subr.bf16.mxu0 0
    %1617 = vmatpush1.bf16.msra.mxu0 0
    %1618 = vmatprep.subr.bf16.mxu0 0
    %1619 = vmatpush1.bf16.msra.mxu0 0
    %1620 = vmatprep.subr.bf16.mxu0 0
    %1621 = vmatpush1.bf16.msra.mxu0 0
    %1622 = vmatprep.mubr.bf16.mxu0 0
    %1623 = vmatmul.mubr.bf16.gmra.mrb[0].mxu0 %v1588
    %v1624 = vpop.f32.mrb[0].mxu0
    %v1625 = vadd.f32 0.0, %v1624
    %v1626 = vpop.f32.mrb[0].mxu0
    %v1627 = vadd.f32 0.0, %v1626
    %v1628 = vpop.f32.mrb[0].mxu0
    %v1629 = vpop.f32.mrb[0].mxu0
    %1630 = vdwg.mxu0
    %1631 = vmatprep.subr.bf16.mxu0 0
    %1632 = vmatpush1.bf16.msra.mxu0 %v162
    %1633 = vmatprep.subr.bf16.mxu0 0
    %1634 = vmatpush1.bf16.msra.mxu0 %v165
    %1635 = vmatprep.subr.bf16.mxu0 0
    %1636 = vmatpush1.bf16.msra.mxu0 %v168
    %1637 = vmatprep.subr.bf16.mxu0 0
    %1638 = vmatpush1.bf16.msra.mxu0 %v171
    %1639 = vmatprep.subr.bf16.mxu0 0
    %1640 = vmatpush1.bf16.msra.mxu0 %v174
    %1641 = vmatprep.subr.bf16.mxu0 0
    %1642 = vmatpush1.bf16.msra.mxu0 %v177
    %1643 = vmatprep.subr.bf16.mxu0 0
    %1644 = vmatpush1.bf16.msra.mxu0 %v180
    %1645 = vmatprep.subr.bf16.mxu0 0
    %1646 = vmatpush1.bf16.msra.mxu0 %v183
    %1647 = vmatprep.subr.bf16.mxu0 0
    %1648 = vmatpush1.bf16.msra.mxu0 0
    %1649 = vmatprep.subr.bf16.mxu0 0
    %1650 = vmatpush1.bf16.msra.mxu0 0
    %1651 = vmatprep.subr.bf16.mxu0 0
    %1652 = vmatpush1.bf16.msra.mxu0 0
    %1653 = vmatprep.subr.bf16.mxu0 0
    %1654 = vmatpush1.bf16.msra.mxu0 0
    %1655 = vmatprep.subr.bf16.mxu0 0
    %1656 = vmatpush1.bf16.msra.mxu0 0
    %1657 = vmatprep.subr.bf16.mxu0 0
    %1658 = vmatpush1.bf16.msra.mxu0 0
    %1659 = vmatprep.subr.bf16.mxu0 0
    %1660 = vmatpush1.bf16.msra.mxu0 0
    %1661 = vmatprep.subr.bf16.mxu0 0
    %1662 = vmatpush1.bf16.msra.mxu0 0
    %1663 = vmatprep.mubr.bf16.mxu0 0
    %1664 = vmatmul.mubr.bf16.gmra.mrb[0].mxu0 %v1588
    %v1665 = vpop.f32.mrb[0].mxu0
    %v1666 = vadd.f32 0.0, %v1665
    %v1667 = vpop.f32.mrb[0].mxu0
    %v1668 = vpop.f32.mrb[0].mxu0
    %v1669 = vpop.f32.mrb[0].mxu0
    %1670 = vdwg.mxu0
    %v1673 = vunpack.c.l.s4 1966171168
    %v1674 = vunpack.c.0.s8 %v1673
    %v1675 = vlaneseq
    %v1676 = vshrl.u32 %v1675, 7
    %v1677 = vsub.s32 %v1674, %v1676
    %v1678 = vrot.slane %v1625, %v1677
    %v1679 = vcombine.high %v1678, %v1678
    %v1681 = vunpack.c.l.s4 1966171168
    %v1682 = vunpack.c.0.s8 %v1681
    %v1683 = vlaneseq
    %v1684 = vshrl.u32 %v1683, 7
    %v1685 = vsub.s32 %v1682, %v1684
    %v1686 = vrot.slane %v1678, %v1685
    %v1688 = vunpack.c.l.s4 1966171168
    %v1689 = vunpack.c.0.s8 %v1688
    %v1690 = vlaneseq
    %v1691 = vshrl.u32 %v1690, 7
    %v1692 = vsub.s32 %v1689, %v1691
    %v1693 = vrot.slane %v1679, %v1692
    %v1696 = vadd.f32 %v1577, %v1686
    %v1697 = vadd.f32 %v1579, %v1693
    %v1698 = vxor.u32 %v1696, 2147483648
    %v1699 = vxor.u32 %v1697, 2147483648
    %v1700 = vmul.f32 %v1698, 1.442695
    %v1701 = vpow.pop %v1700
    %v1702 = vmul.f32 %v1699, 1.442695
    %v1703 = vpow.pop %v1702
    %v1704 = vadd.f32 %v1701, 1.0
    %v1705 = vadd.f32 %v1703, 1.0
    %v1706 = vrcp.pop %v1704
    %v1707 = vmul.f32 1.0, %v1706
    %v1708 = vrcp.pop %v1705
    %v1709 = vmul.f32 1.0, %v1708
    %v1712 = vrot.slane %v1577, 1
    %v1713 = vrot.slane %v1579, 1
    %v1718 = vunpack.c.l.s4 1966171168
    %v1719 = vunpack.c.0.s8 %v1718
    %v1720 = vlaneseq
    %v1721 = vshrl.u32 %v1720, 7
    %v1722 = vsub.s32 %v1719, %v1721
    %v1723 = vrot.slane %v1627, %v1722
    %v1724 = vcombine.high %v1723, %v1723
    %v1726 = vunpack.c.l.s4 1966171168
    %v1727 = vunpack.c.0.s8 %v1726
    %v1728 = vlaneseq
    %v1729 = vshrl.u32 %v1728, 7
    %v1730 = vsub.s32 %v1727, %v1729
    %v1731 = vrot.slane %v1723, %v1730
    %v1733 = vunpack.c.l.s4 1966171168
    %v1734 = vunpack.c.0.s8 %v1733
    %v1735 = vlaneseq
    %v1736 = vshrl.u32 %v1735, 7
    %v1737 = vsub.s32 %v1734, %v1736
    %v1738 = vrot.slane %v1724, %v1737
    %v1741 = vadd.f32 %v1712, %v1731
    %v1742 = vadd.f32 %v1713, %v1738
    %v1743 = vxor.u32 %v1741, 2147483648
    %v1744 = vxor.u32 %v1742, 2147483648
    %v1745 = vmul.f32 %v1743, 1.442695
    %v1746 = vpow.pop %v1745
    %v1747 = vmul.f32 %v1744, 1.442695
    %v1748 = vpow.pop %v1747
    %v1749 = vadd.f32 %v1746, 1.0
    %v1750 = vadd.f32 %v1748, 1.0
    %v1751 = vrcp.pop %v1749
    %v1752 = vmul.f32 1.0, %v1751
    %v1753 = vrcp.pop %v1750
    %v1754 = vmul.f32 1.0, %v1753
    %v1755 = vadd.f32 %v1666, %v377
    %v1758 = vunpack.c.l.s4 1966171168
    %v1759 = vunpack.c.0.s8 %v1758
    %v1760 = vlaneseq
    %v1761 = vshrl.u32 %v1760, 7
    %v1762 = vsub.s32 %v1759, %v1761
    %v1763 = vrot.slane %v1755, %v1762
    %v1764 = vcombine.high %v1763, %v1763
    %v1766 = vunpack.c.l.s4 1966171168
    %v1767 = vunpack.c.0.s8 %v1766
    %v1768 = vlaneseq
    %v1769 = vshrl.u32 %v1768, 7
    %v1770 = vsub.s32 %v1767, %v1769
    %v1771 = vrot.slane %v1763, %v1770
    %v1773 = vunpack.c.l.s4 1966171168
    %v1774 = vunpack.c.0.s8 %v1773
    %v1775 = vlaneseq
    %v1776 = vshrl.u32 %v1775, 7
    %v1777 = vsub.s32 %v1774, %v1776
    %v1778 = vrot.slane %v1764, %v1777
    %v1781 = vmul.f32 %v1707, %v1771
    %v1782 = vmul.f32 %v1709, %v1778
    %v1783 = vrot.slane %v1577, 2
    %v1784 = vrot.slane %v1579, 2
    %v1787 = vadd.f32 %v1783, %v1781
    %v1788 = vadd.f32 %v1784, %v1782
    %v1789 = vtanh.pop %v1787
    %v1790 = vtanh.pop %v1788
    %v1791 = vmul.f32 %v1752, %v1572
    %v1792 = vmul.f32 %v1754, %v1573
    %v1793 = vsub.f32 1.0, %v1752
    %v1794 = vsub.f32 1.0, %v1754
    %v1795 = vmul.f32 %v1793, %v1789
    %v1796 = vmul.f32 %v1794, %v1790
    %v1797 = vadd.f32 %v1791, %v1795
    %v1798 = vadd.f32 %v1792, %v1796
    %1799 = vst [vmem:[#allocation6 + $0x6] sm:$0x1] %v1797
    %1800 = vst [vmem:[#allocation6 + $0xe] sm:$0x1] %v1798
    %s1801 = scalar_lea.vmem %s0, 7
    %v1802 = vld [vmem:[%s1801] ss:$8 sm:$0x7]
    %s1803 = scalar_lea.vmem %s0, 31
    %v1804 = vld [vmem:[%s1803] ss:$8 sm:$0x7]
    %v1805 = vpack.c.bf16 %v1797, %v1797
    %v1806 = vpack.c.bf16 %v1798, %v1798
    %v1809 = vunpack.c.l.b16 %v1805
    %v1810 = vunpack.c.l.b16 %v1806
    %v1811 = vrot.slane %v1810, 7
    %v1812 = vsel %vm461, %v1811, %v1809
    %v1813 = vpack.c.b16 %v1812, %v1812
    %1815 = vmatprep.subr.bf16.mxu0 %v161
    %1816 = vmatpush1.bf16.msra.mxu0 %v160
    %1817 = vmatprep.subr.bf16.mxu0 %v164
    %1818 = vmatpush1.bf16.msra.mxu0 %v163
    %1819 = vmatprep.subr.bf16.mxu0 %v167
    %1820 = vmatpush1.bf16.msra.mxu0 %v166
    %1821 = vmatprep.subr.bf16.mxu0 %v170
    %1822 = vmatpush1.bf16.msra.mxu0 %v169
    %1823 = vmatprep.subr.bf16.mxu0 %v173
    %1824 = vmatpush1.bf16.msra.mxu0 %v172
    %1825 = vmatprep.subr.bf16.mxu0 %v176
    %1826 = vmatpush1.bf16.msra.mxu0 %v175
    %1827 = vmatprep.subr.bf16.mxu0 %v179
    %1828 = vmatpush1.bf16.msra.mxu0 %v178
    %1829 = vmatprep.subr.bf16.mxu0 %v182
    %1830 = vmatpush1.bf16.msra.mxu0 %v181
    %1831 = vmatprep.subr.bf16.mxu0 0
    %1832 = vmatpush1.bf16.msra.mxu0 0
    %1833 = vmatprep.subr.bf16.mxu0 0
    %1834 = vmatpush1.bf16.msra.mxu0 0
    %1835 = vmatprep.subr.bf16.mxu0 0
    %1836 = vmatpush1.bf16.msra.mxu0 0
    %1837 = vmatprep.subr.bf16.mxu0 0
    %1838 = vmatpush1.bf16.msra.mxu0 0
    %1839 = vmatprep.subr.bf16.mxu0 0
    %1840 = vmatpush1.bf16.msra.mxu0 0
    %1841 = vmatprep.subr.bf16.mxu0 0
    %1842 = vmatpush1.bf16.msra.mxu0 0
    %1843 = vmatprep.subr.bf16.mxu0 0
    %1844 = vmatpush1.bf16.msra.mxu0 0
    %1845 = vmatprep.subr.bf16.mxu0 0
    %1846 = vmatpush1.bf16.msra.mxu0 0
    %1847 = vmatprep.mubr.bf16.mxu0 0
    %1848 = vmatmul.mubr.bf16.gmra.mrb[0].mxu0 %v1813
    %v1849 = vpop.f32.mrb[0].mxu0
    %v1850 = vadd.f32 0.0, %v1849
    %v1851 = vpop.f32.mrb[0].mxu0
    %v1852 = vadd.f32 0.0, %v1851
    %v1853 = vpop.f32.mrb[0].mxu0
    %v1854 = vpop.f32.mrb[0].mxu0
    %1855 = vdwg.mxu0
    %1856 = vmatprep.subr.bf16.mxu0 0
    %1857 = vmatpush1.bf16.msra.mxu0 %v162
    %1858 = vmatprep.subr.bf16.mxu0 0
    %1859 = vmatpush1.bf16.msra.mxu0 %v165
    %1860 = vmatprep.subr.bf16.mxu0 0
    %1861 = vmatpush1.bf16.msra.mxu0 %v168
    %1862 = vmatprep.subr.bf16.mxu0 0
    %1863 = vmatpush1.bf16.msra.mxu0 %v171
    %1864 = vmatprep.subr.bf16.mxu0 0
    %1865 = vmatpush1.bf16.msra.mxu0 %v174
    %1866 = vmatprep.subr.bf16.mxu0 0
    %1867 = vmatpush1.bf16.msra.mxu0 %v177
    %1868 = vmatprep.subr.bf16.mxu0 0
    %1869 = vmatpush1.bf16.msra.mxu0 %v180
    %1870 = vmatprep.subr.bf16.mxu0 0
    %1871 = vmatpush1.bf16.msra.mxu0 %v183
    %1872 = vmatprep.subr.bf16.mxu0 0
    %1873 = vmatpush1.bf16.msra.mxu0 0
    %1874 = vmatprep.subr.bf16.mxu0 0
    %1875 = vmatpush1.bf16.msra.mxu0 0
    %1876 = vmatprep.subr.bf16.mxu0 0
    %1877 = vmatpush1.bf16.msra.mxu0 0
    %1878 = vmatprep.subr.bf16.mxu0 0
    %1879 = vmatpush1.bf16.msra.mxu0 0
    %1880 = vmatprep.subr.bf16.mxu0 0
    %1881 = vmatpush1.bf16.msra.mxu0 0
    %1882 = vmatprep.subr.bf16.mxu0 0
    %1883 = vmatpush1.bf16.msra.mxu0 0
    %1884 = vmatprep.subr.bf16.mxu0 0
    %1885 = vmatpush1.bf16.msra.mxu0 0
    %1886 = vmatprep.subr.bf16.mxu0 0
    %1887 = vmatpush1.bf16.msra.mxu0 0
    %1888 = vmatprep.mubr.bf16.mxu0 0
    %1889 = vmatmul.mubr.bf16.gmra.mrb[0].mxu0 %v1813
    %v1890 = vpop.f32.mrb[0].mxu0
    %v1891 = vadd.f32 0.0, %v1890
    %v1892 = vpop.f32.mrb[0].mxu0
    %v1893 = vpop.f32.mrb[0].mxu0
    %v1894 = vpop.f32.mrb[0].mxu0
    %1895 = vdwg.mxu0
    %v1898 = vunpack.c.l.s4 1966171168
    %v1899 = vunpack.c.0.s8 %v1898
    %v1900 = vlaneseq
    %v1901 = vshrl.u32 %v1900, 7
    %v1902 = vsub.s32 %v1899, %v1901
    %v1903 = vrot.slane %v1850, %v1902
    %v1904 = vcombine.high %v1903, %v1903
    %v1906 = vunpack.c.l.s4 1966171168
    %v1907 = vunpack.c.0.s8 %v1906
    %v1908 = vlaneseq
    %v1909 = vshrl.u32 %v1908, 7
    %v1910 = vsub.s32 %v1907, %v1909
    %v1911 = vrot.slane %v1903, %v1910
    %v1913 = vunpack.c.l.s4 1966171168
    %v1914 = vunpack.c.0.s8 %v1913
    %v1915 = vlaneseq
    %v1916 = vshrl.u32 %v1915, 7
    %v1917 = vsub.s32 %v1914, %v1916
    %v1918 = vrot.slane %v1904, %v1917
    %v1921 = vadd.f32 %v1802, %v1911
    %v1922 = vadd.f32 %v1804, %v1918
    %v1923 = vxor.u32 %v1921, 2147483648
    %v1924 = vxor.u32 %v1922, 2147483648
    %v1925 = vmul.f32 %v1923, 1.442695
    %v1926 = vpow.pop %v1925
    %v1927 = vmul.f32 %v1924, 1.442695
    %v1928 = vpow.pop %v1927
    %v1929 = vadd.f32 %v1926, 1.0
    %v1930 = vadd.f32 %v1928, 1.0
    %v1931 = vrcp.pop %v1929
    %v1932 = vmul.f32 1.0, %v1931
    %v1933 = vrcp.pop %v1930
    %v1934 = vmul.f32 1.0, %v1933
    %v1937 = vrot.slane %v1802, 1
    %v1938 = vrot.slane %v1804, 1
    %v1943 = vunpack.c.l.s4 1966171168
    %v1944 = vunpack.c.0.s8 %v1943
    %v1945 = vlaneseq
    %v1946 = vshrl.u32 %v1945, 7
    %v1947 = vsub.s32 %v1944, %v1946
    %v1948 = vrot.slane %v1852, %v1947
    %v1949 = vcombine.high %v1948, %v1948
    %v1951 = vunpack.c.l.s4 1966171168
    %v1952 = vunpack.c.0.s8 %v1951
    %v1953 = vlaneseq
    %v1954 = vshrl.u32 %v1953, 7
    %v1955 = vsub.s32 %v1952, %v1954
    %v1956 = vrot.slane %v1948, %v1955
    %v1958 = vunpack.c.l.s4 1966171168
    %v1959 = vunpack.c.0.s8 %v1958
    %v1960 = vlaneseq
    %v1961 = vshrl.u32 %v1960, 7
    %v1962 = vsub.s32 %v1959, %v1961
    %v1963 = vrot.slane %v1949, %v1962
    %v1966 = vadd.f32 %v1937, %v1956
    %v1967 = vadd.f32 %v1938, %v1963
    %v1968 = vxor.u32 %v1966, 2147483648
    %v1969 = vxor.u32 %v1967, 2147483648
    %v1970 = vmul.f32 %v1968, 1.442695
    %v1971 = vpow.pop %v1970
    %v1972 = vmul.f32 %v1969, 1.442695
    %v1973 = vpow.pop %v1972
    %v1974 = vadd.f32 %v1971, 1.0
    %v1975 = vadd.f32 %v1973, 1.0
    %v1976 = vrcp.pop %v1974
    %v1977 = vmul.f32 1.0, %v1976
    %v1978 = vrcp.pop %v1975
    %v1979 = vmul.f32 1.0, %v1978
    %v1980 = vadd.f32 %v1891, %v377
    %v1983 = vunpack.c.l.s4 1966171168
    %v1984 = vunpack.c.0.s8 %v1983
    %v1985 = vlaneseq
    %v1986 = vshrl.u32 %v1985, 7
    %v1987 = vsub.s32 %v1984, %v1986
    %v1988 = vrot.slane %v1980, %v1987
    %v1989 = vcombine.high %v1988, %v1988
    %v1991 = vunpack.c.l.s4 1966171168
    %v1992 = vunpack.c.0.s8 %v1991
    %v1993 = vlaneseq
    %v1994 = vshrl.u32 %v1993, 7
    %v1995 = vsub.s32 %v1992, %v1994
    %v1996 = vrot.slane %v1988, %v1995
    %v1998 = vunpack.c.l.s4 1966171168
    %v1999 = vunpack.c.0.s8 %v1998
    %v2000 = vlaneseq
    %v2001 = vshrl.u32 %v2000, 7
    %v2002 = vsub.s32 %v1999, %v2001
    %v2003 = vrot.slane %v1989, %v2002
    %v2006 = vmul.f32 %v1932, %v1996
    %v2007 = vmul.f32 %v1934, %v2003
    %v2008 = vrot.slane %v1802, 2
    %v2009 = vrot.slane %v1804, 2
    %v2012 = vadd.f32 %v2008, %v2006
    %v2013 = vadd.f32 %v2009, %v2007
    %v2014 = vtanh.pop %v2012
    %v2015 = vtanh.pop %v2013
    %v2016 = vmul.f32 %v1977, %v1797
    %v2017 = vmul.f32 %v1979, %v1798
    %v2018 = vsub.f32 1.0, %v1977
    %v2019 = vsub.f32 1.0, %v1979
    %v2020 = vmul.f32 %v2018, %v2014
    %v2021 = vmul.f32 %v2019, %v2015
    %v2022 = vadd.f32 %v2016, %v2020
    %v2023 = vadd.f32 %v2017, %v2021
    %2024 = vst [vmem:[#allocation6 + $0x7] sm:$0x1] %v2022
    %2025 = vst [vmem:[#allocation6 + $0xf] sm:$0x1] %v2023
    %v2028 = vcombine.low %v2022, %v2023
    %v2030 = vunpack.c.l.s4 1966171168
    %v2031 = vunpack.c.0.s8 %v2030
    %v2032 = vlaneseq
    %v2033 = vshrl.u32 %v2032, 7
    %v2034 = vsub.s32 %v2031, %v2033
    %v2035 = vrot.slane %v2028, %v2034
    %v2037 = vunpack.c.l.s4 1966171168
    %v2038 = vunpack.c.0.s8 %v2037
    %v2039 = vlaneseq
    %v2040 = vshrl.u32 %v2039, 7
    %v2041 = vsub.s32 %v2038, %v2040
    %v2042 = vrot.slane %v2035, %v2041
    %2044 = vst [vmem:[#allocation2] sm:$0x3] %v2042
    // Predicated region
    $region26: #{gru_forward.3} parent=1 // pred_check
      %p2045 = pneg %p36
    $region27: #{gru_forward.3} parent=1 // pred_check_branch
      %2047 = sbr.rel (%p2045) target = $region29
    $region28: #{gru_forward.3} parent=1 // pred_region
      %2048 = vst [vmem:[#allocation7] sm:$0x3] %v2042
    $region29: #{gru_forward.3} parent=1 // pred_fallthru
      _
    // Predicated region
    $region30: #{gru_forward.3} parent=1 // pred_check
      _
    $region31: #{gru_forward.3} parent=1 // pred_check_branch
      %2050 = sbr.rel (0) target = $region33
    $region32: #{gru_forward.3} parent=1 // pred_region
      %s2052 = ssub.s32 256, 256
      %2053 = vsyncadd [#allocation5], %s2052
      %s2054 = sshll.u32 [#allocation6], 4
      %s2055 = int_to_ptr.vmem [resolvable:$true] %s2054
      %2060 = dma.vmem_to_hbm [thread:$0]  %s2055, 256, %s4, [#allocation5], 128, 128, 8
    $region33: #{gru_forward.3} parent=1 // pred_fallthru
      _
    // Predicated region
    $region34: #{gru_forward.3} parent=1 // pred_check
      _
    $region35: #{gru_forward.3} parent=1 // pred_check_branch
      %2062 = sbr.rel (0) target = $region37
    $region36: #{gru_forward.3} parent=1 // pred_region
      %s2064 = ssub.s32 32, 32
      %2065 = vsyncadd [#allocation8], %s2064
      %s2067 = sshll.u32 [#allocation7], 4
      %s2068 = int_to_ptr.vmem [resolvable:$true] %s2067
      %2070 = dma.vmem_to_hbm [thread:$0]  %s2068, 32, %s5, [#allocation8]
    $region37: #{gru_forward.3} parent=1 // pred_fallthru
      _
    // Predicated region
    $region38: #{gru_forward.3} parent=1 // pred_check
      _
    $region39: #{gru_forward.3} parent=1 // pred_check_branch
      %2072 = sbr.rel (0) target = $region41
    $region40: #{gru_forward.3} parent=1 // pred_region
      %2073 = dma.done [#allocation5], 256
    $region41: #{gru_forward.3} parent=1 // pred_fallthru
      _
    // Predicated region
    $region42: #{gru_forward.3} parent=1 // pred_check
      _
    $region43: #{gru_forward.3} parent=1 // pred_check_branch
      %2075 = sbr.rel (0) target = $region45
    $region44: #{gru_forward.3} parent=1 // pred_region
      %2076 = dma.done [#allocation8], 32
    $region45: #{gru_forward.3} parent=1 // pred_fallthru
      _
    %2077 = vsyncpa [#allocation4], 1
    %2078 = vsyncpa [#allocation5], 1
    %2079 = vsyncpa [#allocation8], 1

</llo_original>
